<compile_context>
chip_gen: v6e
topology: v6e:2x2x1
jax: 0.10.0
libtpu: 0.0.40
codegen_flags: <defaults>
</compile_context>

<pallas_src>
import functools
import math

import numpy as np
import jax
import jax.numpy as jnp
from jax.experimental import pallas as pl
from jax.experimental.pallas import tpu as pltpu


# ============================= Pallas kernels ================================

_TN = 512   # lane-tile for the generic matmul (multiple of 128)
_TK = 512   # contraction tile (multiple of 128)


def _round_up(x, m):
    return ((x + m - 1) // m) * m


def _mm_bias_act_kernel(apply_softplus, has_bias, relu_out, *refs):
    """acc += act(A_tile) @ B_tile ; epilogue adds per-row bias (+ReLU) on last K step."""
    if has_bias:
        a_ref, b_ref, bias_ref, o_ref, acc_ref = refs
    else:
        a_ref, b_ref, o_ref, acc_ref = refs
        bias_ref = None

    k = pl.program_id(1)

    @pl.when(k == 0)
    def _init():
        acc_ref[...] = jnp.zeros_like(acc_ref)

    a = a_ref[...]
    if apply_softplus:
        # PyTorch nn.Softplus(beta=1, threshold=20), fused into the operand load.
        a = jnp.where(a > 20.0, a, jnp.log1p(jnp.exp(jnp.minimum(a, 20.0))))
    acc_ref[...] += jnp.dot(a, b_ref[...], preferred_element_type=jnp.float32)

    @pl.when(k == pl.num_programs(1) - 1)
    def _fin():
        r = acc_ref[...]
        if has_bias:
            r = r + bias_ref[...]          # [M,1] broadcast along lanes
        if relu_out:
            r = jnp.maximum(r, 0.0)
        o_ref[...] = r


def fused_matmul(a, b, bias_rows=None, apply_softplus=False, relu_out=False):
    """C = act(A) @ B (+ bias per row, + optional ReLU), gridded over (N, K).

    A: [M, K] (M small: batch*channels), B: [K, N] with N lane-dense.
    K/N are tiled at 512 when large (constants are small enough at these
    bandwidths that no runtime padding triggers); M stays a single full block.
    """
    a = jnp.asarray(a, jnp.float32)
    b = jnp.asarray(b, jnp.float32)
    M, K = a.shape
    K2, N = b.shape
    assert K == K2

    if K <= _TK:
        tk, Kp = K, K
    else:
        tk, Kp = _TK, _round_up(K, _TK)
    if N <= _TN:
        tn, Np = N, N
    else:
        tn, Np = _TN, _round_up(N, _TN)
    if Kp != K:
        a = jnp.pad(a, ((0, 0), (0, Kp - K)))
        b = jnp.pad(b, ((0, Kp - K), (0, 0)))
    if Np != N:
        b = jnp.pad(b, ((0, 0), (0, Np - N)))

    grid = (Np // tn, Kp // tk)            # (N parallel, K arbitrary innermost)

    in_specs = [pl.BlockSpec((M, tk), lambda j, k: (0, k)),
                pl.BlockSpec((tk, tn), lambda j, k: (k, j))]
    args = [a, b]
    has_bias = bias_rows is not None
    if has_bias:
        in_specs.append(pl.BlockSpec((M, 1), lambda j, k: (0, 0)))
        args.append(jnp.asarray(bias_rows, jnp.float32).reshape(M, 1))

    out = pl.pallas_call(
        functools.partial(_mm_bias_act_kernel, apply_softplus, has_bias, relu_out),
        out_shape=jax.ShapeDtypeStruct((M, Np), jnp.float32),
        grid=grid,
        in_specs=in_specs,
        out_specs=pl.BlockSpec((M, tn), lambda j, k: (0, j)),
        scratch_shapes=[pltpu.VMEM((M, tn), jnp.float32)],
        compiler_params=pltpu.CompilerParams(
            dimension_semantics=("parallel", "arbitrary")),
    )(*args)
    return out[:, :N] if Np != N else out


def _spectral_mm_kernel(a_ref, b_ref, o_ref):
    o_ref[0] = jnp.dot(a_ref[0], b_ref[0], preferred_element_type=jnp.float32)


def spectral_product(a3, b3):
    """Fused per-degree spectral product: one pallas_call, grid over the degree l.

    a3: [b_out, Lmax*batch, Kc], b3: [b_out, Kc, 2*Lmax*f_out] (re/im packed in
    the last dim via the concatenated-K complex-matmul trick).
    """
    Ld, Mp, Kc = a3.shape
    _, _, Nc = b3.shape
    return pl.pallas_call(
        _spectral_mm_kernel,
        out_shape=jax.ShapeDtypeStruct((Ld, Mp, Nc), jnp.float32),
        grid=(Ld,),
        in_specs=[pl.BlockSpec((1, Mp, Kc), lambda l: (l, 0, 0)),
                  pl.BlockSpec((1, Kc, Nc), lambda l: (l, 0, 0))],
        out_specs=pl.BlockSpec((1, Mp, Nc), lambda l: (l, 0, 0)),
        compiler_params=pltpu.CompilerParams(dimension_semantics=("parallel",)),
    )(a3, b3)


# ================== numpy precompute (Wigner-d, grids, matrices) =============

def _wigner_d(l, beta):
    """Wigner small-d matrix d^l_{m',m}(beta), centered order, CS phase."""
    d = np.zeros((2 * l + 1, 2 * l + 1), dtype=np.float64)
    c = np.cos(beta / 2.0)
    s = np.sin(beta / 2.0)
    f = math.factorial
    for i_mp, mp in enumerate(range(-l, l + 1)):
        for i_m, m in enumerate(range(-l, l + 1)):
            pref = math.sqrt(f(l + mp) * f(l - mp) * f(l + m) * f(l - m))
            kmin = max(0, m - mp)
            kmax = min(l + m, l - mp)
            tot = 0.0
            for k in range(kmin, kmax + 1):
                tot += ((-1.0) ** (mp - m + k)
                        / (f(l + m - k) * f(k) * f(mp - m + k) * f(l - mp - k))
                        * c ** (2 * l + m - mp - 2 * k) * s ** (mp - m + 2 * k))
            d[i_mp, i_m] = pref * tot
    return d


def _quadrature_weights(b):
    """SOFT quadrature weights (lie_learn S3 normalization, Haar mass 1)."""
    k = np.arange(b)
    w = np.array([
        (2.0 / b) * np.sin(np.pi * (2 * j + 1) / (4.0 * b))
        * np.sum(np.sin((2 * j + 1) * (2 * k + 1) * np.pi / (4.0 * b)) / (2 * k + 1))
        for j in range(2 * b)])
    w /= 2.0 * (2 * b) ** 2
    return w


def s2_equatorial_grid(max_beta=0.0, n_alpha=32, n_beta=1):
    beta = np.linspace(np.pi / 2 - max_beta, np.pi / 2 + max_beta, n_beta)
    alpha = np.linspace(0, 2 * np.pi, n_alpha, endpoint=False)
    B, A = np.meshgrid(beta, alpha, indexing="ij")
    return tuple((float(b), float(a)) for b, a in zip(B.flatten(), A.flatten()))


def so3_equatorial_grid(max_beta=0.0, max_gamma=0.0, n_alpha=32, n_beta=1, n_gamma=1):
    beta = np.linspace(np.pi / 2 - max_beta, np.pi / 2 + max_beta, n_beta)
    alpha = np.linspace(0, 2 * np.pi, n_alpha, endpoint=False)
    gamma = np.linspace(-max_gamma, max_gamma, n_gamma)
    B, A, C = np.meshgrid(beta, alpha, gamma, indexing="ij")
    return tuple((float(b), float(a), float(c))
                 for b, a, c in zip(B.flatten(), A.flatten(), C.flatten()))


def _s2_fft_matrix(b_in, b_out):
    """[l*m, (2b_in)^2] complex analysis matrix for S2 signals (quadrature weighted)."""
    betas = (np.arange(2 * b_in) + 0.5) / (2 * b_in) * np.pi
    w = _quadrature_weights(b_in) * 2 * b_in
    a_idx = np.arange(2 * b_in)
    nspec = b_out ** 2
    F = np.zeros((nspec, 2 * b_in, 2 * b_in), dtype=np.complex128)
    for l in range(b_out):
        dcol = np.stack([_wigner_d(l, bt)[:, l] for bt in betas])  # [beta, m]
        for i_m, m in enumerate(range(-l, l + 1)):
            phase = np.exp(-2j * np.pi * m * a_idx / (2 * b_in))
            F[l * l + i_m] = (w * dcol[:, i_m])[:, None] * phase[None, :]
    return F.reshape(nspec, -1)


def _s2_rft_matrix(b_out, grid):
    """[n_grid, l*m] complex: sqrt(2l+1) * D^l_{m,0}(alpha, beta, 0)."""
    nspec = b_out ** 2
    F = np.zeros((len(grid), nspec), dtype=np.complex128)
    for i, (beta, alpha) in enumerate(grid):
        cols = []
        for l in range(b_out):
            d = _wigner_d(l, beta)[:, l]
            m = np.arange(-l, l + 1)
            cols.append(np.sqrt(2 * l + 1) * np.exp(-1j * m * alpha) * d)
        F[i] = np.concatenate(cols)
    return F


def _so3_fft_matrix(b_in, b_out):
    """[l*m*n, (2b_in)^3] complex analysis matrix for SO(3) signals."""
    betas = (np.arange(2 * b_in) + 0.5) / (2 * b_in) * np.pi
    w = _quadrature_weights(b_in)
    idx = np.arange(2 * b_in)
    nspec = b_out * (4 * b_out ** 2 - 1) // 3
    H = np.zeros((nspec, 2 * b_in, 2 * b_in, 2 * b_in), dtype=np.complex128)
    off = 0
    for l in range(b_out):
        d = np.stack([_wigner_d(l, bt) for bt in betas])  # [beta, m, n]
        for i_m, m in enumerate(range(-l, l + 1)):
            pa = np.exp(-2j * np.pi * m * idx / (2 * b_in))
            for i_n, n in enumerate(range(-l, l + 1)):
                pg = np.exp(-2j * np.pi * n * idx / (2 * b_in))
                H[off + i_m * (2 * l + 1) + i_n] = (
                    (w * d[:, i_m, i_n])[:, None, None] * pa[None, :, None] * pg[None, None, :])
        off += (2 * l + 1) ** 2
    return H.reshape(nspec, -1)


def _so3_rft_matrix(b_out, grid):
    """[n_grid, l*m*n] complex: sqrt(2l+1) * D^l_{m,n}(alpha, beta, gamma)."""
    nspec = b_out * (4 * b_out ** 2 - 1) // 3
    F = np.zeros((len(grid), nspec), dtype=np.complex128)
    for i, (beta, alpha, gamma) in enumerate(grid):
        cols = []
        for l in range(b_out):
            d = _wigner_d(l, beta)
            m = np.arange(-l, l + 1)
            D = np.exp(-1j * m * alpha)[:, None] * d * np.exp(-1j * m * gamma)[None, :]
            cols.append(np.sqrt(2 * l + 1) * D.reshape(-1))
        F[i] = np.concatenate(cols)
    return F


def _so3_ifft_matrix(b):
    """[(2b)^3, l*m*n] complex synthesis matrix; rows ordered (beta, alpha, gamma)."""
    nspec = b * (4 * b ** 2 - 1) // 3
    betas = (np.arange(2 * b) + 0.5) / (2 * b) * np.pi
    idx = np.arange(2 * b)
    G = np.zeros((2 * b, 2 * b, 2 * b, nspec), dtype=np.complex128)
    off = 0
    for l in range(b):
        d = np.stack([_wigner_d(l, bt) for bt in betas])  # [beta, m, n]
        for i_m, m in enumerate(range(-l, l + 1)):
            pa = np.exp(2j * np.pi * m * idx / (2 * b))
            for i_n, n in enumerate(range(-l, l + 1)):
                pg = np.exp(2j * np.pi * n * idx / (2 * b))
                G[:, :, :, off + i_m * (2 * l + 1) + i_n] = (
                    (2 * l + 1) * d[:, i_m, i_n][:, None, None]
                    * pa[None, :, None] * pg[None, None, :])
        off += (2 * l + 1) ** 2
    return G.reshape(-1, nspec)


# ============ constant gather tables for the fused spectral product ===========

def _build_smm_indices(kind, b_out, f_in, f_out, batch, nspec_x):
    """Index tables (built once) that
      * assemble the padded per-degree operands A3/B3 of the spectral product
        (re/im packed via the concatenated-K complex-matmul trick, conj folded
        into B with a negated source copy), and
      * scatter its output back to the [batch*f_out, 2*nspec_z] layout consumed
        by the lane-dense inverse-FFT matmul.
    """
    Lmax = 2 * b_out - 1
    Mp = Lmax * batch
    Kc = 2 * f_in if kind == "s2" else 2 * f_in * Lmax
    Nc = 2 * Lmax * f_out
    nspec_z = b_out * (4 * b_out ** 2 - 1) // 3

    xf_size = batch * f_in * 2 * nspec_x
    y_size = f_in * f_out * 2 * nspec_x
    a_sent = xf_size          # appended zero in the A gather source
    b_sent = 2 * y_size       # appended zero in the B gather source

    a_idx = np.full((b_out, Mp, Kc), a_sent, dtype=np.int32)
    b_idx = np.full((b_out, Kc, Nc), b_sent, dtype=np.int32)
    z_idx = np.zeros((batch * f_out, 2 * nspec_z), dtype=np.int32)

    def xf_flat(p, j, bb, c):          # XF layout: [batch*f_in, 2*nspec_x]
        return (bb * f_in + c) * (2 * nspec_x) + p * nspec_x + j

    def y_flat(p, j, c, f, neg):       # Y layout: [f_in*f_out, 2*nspec_x]; neg -> -Y copy
        return neg * y_size + (c * f_out + f) * (2 * nspec_x) + p * nspec_x + j

    for l in range(b_out):
        L = 2 * l + 1
        off_x = l * l if kind == "s2" else l * (4 * l * l - 1) // 3
        off_z = l * (4 * l * l - 1) // 3

        # ---- A3: rows (m, batch), cols (re/im, c[, n]) ----
        for m in range(L):
            for bb in range(batch):
                row = m * batch + bb
                for q in range(2):
                    for c in range(f_in):
                        if kind == "s2":
                            a_idx[l, row, q * f_in + c] = xf_flat(q, off_x + m, bb, c)
                        else:
                            for n in range(L):
                                a_idx[l, row, q * f_in * Lmax + c * Lmax + n] = xf_flat(
                                    q, off_x + m * L + n, bb, c)

        # ---- B3: conj(Y) with re/im packed into [Cr | Ci] column blocks ----
        # (q,p) -> value:  (0,0) Yr   (0,1) -Yi   (1,0) Yi   (1,1) Yr
        if kind == "s2":
            for c in range(f_in):
                for iy in range(L):                       # y-side order n
                    j = off_x + iy
                    for f in range(f_out):
                        c0 = iy * f_out + f
                        c1 = Lmax * f_out + iy * f_out + f
                        b_idx[l, c, c0] = y_flat(0, j, c, f, 0)
                        b_idx[l, c, c1] = y_flat(1, j, c, f, 1)
                        b_idx[l, f_in + c, c0] = y_flat(1, j, c, f, 0)
                        b_idx[l, f_in + c, c1] = y_flat(0, j, c, f, 0)
        else:
            for c in range(f_in):
                for n in range(L):
                    r0 = c * Lmax + n
                    r1 = f_in * Lmax + c * Lmax + n
                    for iy in range(L):                   # y-side order m'
                        j = off_x + iy * L + n
                        for f in range(f_out):
                            c0 = iy * f_out + f
                            c1 = Lmax * f_out + iy * f_out + f
                            b_idx[l, r0, c0] = y_flat(0, j, c, f, 0)
                            b_idx[l, r0, c1] = y_flat(1, j, c, f, 1)
                            b_idx[l, r1, c0] = y_flat(1, j, c, f, 0)
                            b_idx[l, r1, c1] = y_flat(0, j, c, f, 0)

        # ---- Z gather: C3[l, (m,b), (p, iy, f)] -> Zcat[(b,f), p*nspec_z + jz] ----
        for m in range(L):
            for iy in range(L):
                jz = off_z + m * L + iy
                for bb in range(batch):
                    base = l * (Mp * Nc) + (m * batch + bb) * Nc
                    for f in range(f_out):
                        z_idx[bb * f_out + f, jz] = base + iy * f_out + f
                        z_idx[bb * f_out + f, nspec_z + jz] = (
                            base + Lmax * f_out + iy * f_out + f)

    return a_idx, b_idx, z_idx


# ============================== module assembly ===============================

def _build_layer(kind, b_in, b_out, f_in, f_out, batch):
    if kind == "s2":
        grid = s2_equatorial_grid(max_beta=0.0, n_alpha=2 * b_in, n_beta=1)
        F = _s2_fft_matrix(b_in, b_out)
        K = _s2_rft_matrix(b_out, grid)
        scaling = 1.0 / math.sqrt(len(grid) * f_in * (b_out ** 4.0) / (b_in ** 2.0))
        nspec_x = b_out ** 2
    else:
        grid = so3_equatorial_grid(max_beta=0.0, max_gamma=0.0,
                                   n_alpha=2 * b_in, n_beta=1, n_gamma=1)
        F = _so3_fft_matrix(b_in, b_out)
        K = _so3_rft_matrix(b_out, grid)
        scaling = 1.0 / math.sqrt(len(grid) * f_in * (b_out ** 3.0) / (b_in ** 3.0))
        nspec_x = b_out * (4 * b_out ** 2 - 1) // 3
    G = _so3_ifft_matrix(b_out)

    # Pre-packed constants (built once, never padded / re-laid-out per call):
    Fcat = np.concatenate([F.real.T, F.imag.T], axis=1)        # [n_spatial_in, 2*nspec]
    Kcat = scaling * np.concatenate([K.real, K.imag], axis=1)  # [n_grid, 2*nspec]
    Gcat = np.concatenate([G.real.T, -G.imag.T], axis=0)       # [2*nspec_z, (2b_out)^3]

    a_idx, b_idx, z_idx = _build_smm_indices(kind, b_out, f_in, f_out, batch, nspec_x)
    return dict(
        kind=kind, b_in=b_in, b_out=b_out, f_in=f_in, f_out=f_out, n_grid=len(grid),
        Fcat=jnp.asarray(Fcat, jnp.float32),
        Kcat=jnp.asarray(Kcat, jnp.float32),
        Gcat=jnp.asarray(Gcat, jnp.float32),
        a_idx=jnp.asarray(a_idx), b_idx=jnp.asarray(b_idx), z_idx=jnp.asarray(z_idx),
        softplus_in=(kind == "so3"))


def build_s2cnn_equators(bandwidths, features, key, batch, last_relu=False, bn=False):
    assert len(bandwidths) == len(features)
    # TODO(synk): bn=True (nn.BatchNorm3d) branch not implemented; default bn=False only.
    assert not bn
    params, layer_cfgs = {}, []

    key, k1 = jax.random.split(key)
    lyr = _build_layer("s2", bandwidths[0], bandwidths[1], features[0], features[1], batch)
    params["s2_kernel"] = jax.random.uniform(
        k1, (features[0], features[1], lyr["n_grid"]),
        minval=-1.0, maxval=1.0, dtype=jnp.float32)
    params["s2_bias"] = jnp.zeros((1, features[1], 1, 1, 1), jnp.float32)
    lyr["kernel_key"], lyr["bias_key"] = "s2_kernel", "s2_bias"
    layer_cfgs.append(lyr)

    for li in range(1, len(features) - 1):
        key, kk = jax.random.split(key)
        lyr = _build_layer("so3", bandwidths[li], bandwidths[li + 1],
                           features[li], features[li + 1], batch)
        params[f"so3_kernel_{li}"] = jax.random.uniform(
            kk, (features[li], features[li + 1], lyr["n_grid"]),
            minval=-1.0, maxval=1.0, dtype=jnp.float32)
        params[f"so3_bias_{li}"] = jnp.zeros((1, features[li + 1], 1, 1, 1), jnp.float32)
        lyr["kernel_key"], lyr["bias_key"] = f"so3_kernel_{li}", f"so3_bias_{li}"
        layer_cfgs.append(lyr)

    model = dict(layers=layer_cfgs, last_relu=last_relu, batch=batch)
    return params, model


# ============================== layer forward =================================

def _conv_layer(x, kernel, bias, lyr, relu_out):
    """S2 / SO3 spherical convolution (+ fused pre-Softplus / bias / ReLU)."""
    batch, f_in = x.shape[0], x.shape[1]
    f_out, b_out = lyr["f_out"], lyr["b_out"]
    n_out = 2 * b_out

    # 1) forward S2/SO3 FFT (real input fast path), lane-dense [re|im] spectrum.
    #    The Softplus preceding every SO3Convolution is fused into this matmul.
    x2 = x.reshape(batch * f_in, -1)
    xf = fused_matmul(x2, lyr["Fcat"], apply_softplus=lyr["softplus_in"])

    # 2) kernel real Fourier transform (scaling pre-folded into Kcat at build).
    y = fused_matmul(kernel.reshape(f_in * f_out, -1), lyr["Kcat"])

    # 3) per-degree spectral product: constant-index gathers assemble the padded
    #    per-degree operands, then ONE gridded pallas_call over all degrees.
    src_a = jnp.concatenate([xf.reshape(-1), jnp.zeros((1,), jnp.float32)])
    yf = y.reshape(-1)
    src_b = jnp.concatenate([yf, -yf, jnp.zeros((1,), jnp.float32)])
    a3 = jnp.take(src_a, lyr["a_idx"])
    b3 = jnp.take(src_b, lyr["b_idx"])
    c3 = spectral_product(a3, b3)
    zcat = jnp.take(c3.reshape(-1), lyr["z_idx"])      # [batch*f_out, 2*nspec_z]

    # 4) inverse SO(3) FFT (real-output fast path, lane-dense (2b)^3 output)
    #    with the bias add (+ optional final ReLU) fused into the epilogue.
    bias_rows = jnp.broadcast_to(bias.reshape(1, f_out), (batch, f_out)).reshape(batch * f_out, 1)
    out = fused_matmul(zcat, lyr["Gcat"], bias_rows=bias_rows, relu_out=relu_out)
    return out.reshape(batch, f_out, n_out, n_out, n_out)


def s2cnn_equators_forward(x, params, model):
    layers = model["layers"]
    x_1 = None
    h = x
    for i, lyr in enumerate(layers):
        is_last = i == len(layers) - 1
        fuse_relu = bool(model["last_relu"]) and is_last and i > 0
        h = _conv_layer(h, params[lyr["kernel_key"]], params[lyr["bias_key"]],
                        lyr, relu_out=fuse_relu)
        if i == 0:
            x_1 = h
    if model["last_relu"] and len(layers) == 1:
        h = jnp.maximum(h, 0.0)
    return x_1, h


# ==================================== main ====================================

if __name__ == "__main__":
    bandwidths = [4, 3, 2]
    features = [3, 4, 5]
    batch = 2

    key = jax.random.PRNGKey(0)
    key, kx, kp = jax.random.split(key, 3)
    params, model = build_s2cnn_equators(bandwidths, features, kp, batch=batch)

    x = jax.random.normal(
        kx, (batch, features[0], 2 * bandwidths[0], 2 * bandwidths[0]), dtype=jnp.float32)

    fwd = jax.jit(functools.partial(s2cnn_equators_forward, model=model))
    x_1, x_2 = fwd(x, params)
    jax.block_until_ready((x_1, x_2))

    assert x_1.shape == (batch, features[1],
                         2 * bandwidths[1], 2 * bandwidths[1], 2 * bandwidths[1])
    assert x_2.shape == (batch, features[2],
                         2 * bandwidths[2], 2 * bandwidths[2], 2 * bandwidths[2])
    assert x_1.dtype == jnp.float32 and x_2.dtype == jnp.float32
    assert bool(jnp.all(jnp.isfinite(x_1))) and bool(jnp.all(jnp.isfinite(x_2)))
    print("KERNEL_OK")
</pallas_src>

<mosaic_0001>
module attributes {stable_mosaic.version = 11 : i64} {
  func.func @_mm_bias_act_kernel(%arg0: i32, %arg1: i32, %arg2: memref<6x64xf32, #tpu.memory_space<vmem>>, %arg3: memref<64x18xf32, #tpu.memory_space<vmem>>, %arg4: memref<6x18xf32, #tpu.memory_space<vmem>>, %arg5: memref<6x18xf32, #tpu.memory_space<vmem>>) attributes {dimension_semantics = [#tpu.dimension_semantics<parallel>, #tpu.dimension_semantics<arbitrary>], iteration_bounds = array<i64: 1, 1>, scalar_prefetch = 0 : i64, scratch_operands = 1 : i64, tpu.core_type = #tpu.core_type<tc>, window_params = [{transform_indices = @transform_0, window_bounds = array<i64: 6, 64>}, {transform_indices = @transform_1, window_bounds = array<i64: 64, 18>}, {transform_indices = @transform_2, window_bounds = array<i64: 6, 18>}]} {
    %c0_i32 = arith.constant 0 : i32
    %0 = arith.cmpi eq, %arg1, %c0_i32 : i32
    %1 = arith.extui %0 : i1 to i32
    %c0_i32_0 = arith.constant 0 : i32
    %2 = arith.cmpi ne, %1, %c0_i32_0 : i32
    scf.if %2 {
      %cst_10 = arith.constant 0.000000e+00 : f32
      %12 = vector.broadcast %cst_10 : f32 to vector<6x18xf32>
      %c0_11 = arith.constant 0 : index
      %c0_12 = arith.constant 0 : index
      %13 = vector.load %arg5[%c0_11, %c0_12] : memref<6x18xf32, #tpu.memory_space<vmem>>, vector<6x18xf32>
      tpu.vector_store %arg5[%c0_11, %c0_12], %12 {strides = array<i32>} : memref<6x18xf32, #tpu.memory_space<vmem>>, vector<6x18xf32>,
    } else {
    }
    %c0 = arith.constant 0 : index
    %c0_1 = arith.constant 0 : index
    %3 = vector.load %arg2[%c0, %c0_1] : memref<6x64xf32, #tpu.memory_space<vmem>>, vector<6x64xf32>
    %c0_2 = arith.constant 0 : index
    %c0_3 = arith.constant 0 : index
    %4 = vector.load %arg5[%c0_2, %c0_3] : memref<6x18xf32, #tpu.memory_space<vmem>>, vector<6x18xf32>
    %c0_4 = arith.constant 0 : index
    %c0_5 = arith.constant 0 : index
    %5 = vector.load %arg3[%c0_4, %c0_5] : memref<64x18xf32, #tpu.memory_space<vmem>>, vector<64x18xf32>
    %cst = arith.constant dense<0.000000e+00> : vector<6x18xf32>
    %6 = tpu.matmul %3, %5, %cst {dimension_numbers = #tpu.dot_dimension_numbers<[1], [0], [0], [1], [0, 0, 1, 1], [], []>} : vector<6x64xf32>, vector<64x18xf32>, vector<6x18xf32> -> vector<6x18xf32>
    %7 = arith.addf %4, %6 : vector<6x18xf32>
    %c0_6 = arith.constant 0 : index
    %c0_7 = arith.constant 0 : index
    %8 = vector.load %arg5[%c0_6, %c0_7] : memref<6x18xf32, #tpu.memory_space<vmem>>, vector<6x18xf32>
    tpu.vector_store %arg5[%c0_6, %c0_7], %7 {strides = array<i32>} : memref<6x18xf32, #tpu.memory_space<vmem>>, vector<6x18xf32>,
    %c0_i32_8 = arith.constant 0 : i32
    %9 = arith.cmpi eq, %arg1, %c0_i32_8 : i32
    %10 = arith.extui %9 : i1 to i32
    %c0_i32_9 = arith.constant 0 : i32
    %11 = arith.cmpi ne, %10, %c0_i32_9 : i32
    scf.if %11 {
      %c0_10 = arith.constant 0 : index
      %c0_11 = arith.constant 0 : index
      %12 = vector.load %arg5[%c0_10, %c0_11] : memref<6x18xf32, #tpu.memory_space<vmem>>, vector<6x18xf32>
      %c0_12 = arith.constant 0 : index
      %c0_13 = arith.constant 0 : index
      %13 = vector.load %arg4[%c0_12, %c0_13] : memref<6x18xf32, #tpu.memory_space<vmem>>, vector<6x18xf32>
      tpu.vector_store %arg4[%c0_12, %c0_13], %12 {strides = array<i32>} : memref<6x18xf32, #tpu.memory_space<vmem>>, vector<6x18xf32>,
    } else {
    }
    return
  }
  func.func @transform_0(%arg0: i32, %arg1: i32) -> (i32, i32) {
    %c0_i32 = arith.constant 0 : i32
    %c0_i32_0 = arith.constant 0 : i32
    return %c0_i32, %arg1 : i32, i32
  }
  func.func @transform_1(%arg0: i32, %arg1: i32) -> (i32, i32) {
    %c0_i32 = arith.constant 0 : i32
    return %arg1, %arg0 : i32, i32
  }
  func.func @transform_2(%arg0: i32, %arg1: i32) -> (i32, i32) {
    %c0_i32 = arith.constant 0 : i32
    %c0_i32_0 = arith.constant 0 : i32
    return %c0_i32, %arg0 : i32, i32
  }
}

module attributes {stable_mosaic.version = 11 : i64} {
  func.func @_mm_bias_act_kernel(%arg0: i32, %arg1: i32, %arg2: memref<12x8xf32, #tpu.memory_space<vmem>>, %arg3: memref<8x18xf32, #tpu.memory_space<vmem>>, %arg4: memref<12x18xf32, #tpu.memory_space<vmem>>, %arg5: memref<12x18xf32, #tpu.memory_space<vmem>>) attributes {dimension_semantics = [#tpu.dimension_semantics<parallel>, #tpu.dimension_semantics<arbitrary>], iteration_bounds = array<i64: 1, 1>, scalar_prefetch = 0 : i64, scratch_operands = 1 : i64, tpu.core_type = #tpu.core_type<tc>, window_params = [{transform_indices = @transform_0, window_bounds = array<i64: 12, 8>}, {transform_indices = @transform_1, window_bounds = array<i64: 8, 18>}, {transform_indices = @transform_2, window_bounds = array<i64: 12, 18>}]} {
    %c0_i32 = arith.constant 0 : i32
    %0 = arith.cmpi eq, %arg1, %c0_i32 : i32
    %1 = arith.extui %0 : i1 to i32
    %c0_i32_0 = arith.constant 0 : i32
    %2 = arith.cmpi ne, %1, %c0_i32_0 : i32
    scf.if %2 {
      %cst_10 = arith.constant 0.000000e+00 : f32
      %12 = vector.broadcast %cst_10 : f32 to vector<12x18xf32>
      %c0_11 = arith.constant 0 : index
      %c0_12 = arith.constant 0 : index
      %13 = vector.load %arg5[%c0_11, %c0_12] : memref<12x18xf32, #tpu.memory_space<vmem>>, vector<12x18xf32>
      tpu.vector_store %arg5[%c0_11, %c0_12], %12 {strides = array<i32>} : memref<12x18xf32, #tpu.memory_space<vmem>>, vector<12x18xf32>,
    } else {
    }
    %c0 = arith.constant 0 : index
    %c0_1 = arith.constant 0 : index
    %3 = vector.load %arg2[%c0, %c0_1] : memref<12x8xf32, #tpu.memory_space<vmem>>, vector<12x8xf32>
    %c0_2 = arith.constant 0 : index
    %c0_3 = arith.constant 0 : index
    %4 = vector.load %arg5[%c0_2, %c0_3] : memref<12x18xf32, #tpu.memory_space<vmem>>, vector<12x18xf32>
    %c0_4 = arith.constant 0 : index
    %c0_5 = arith.constant 0 : index
    %5 = vector.load %arg3[%c0_4, %c0_5] : memref<8x18xf32, #tpu.memory_space<vmem>>, vector<8x18xf32>
    %cst = arith.constant dense<0.000000e+00> : vector<12x18xf32>
    %6 = tpu.matmul %3, %5, %cst {dimension_numbers = #tpu.dot_dimension_numbers<[1], [0], [0], [1], [0, 0, 1, 1], [], []>} : vector<12x8xf32>, vector<8x18xf32>, vector<12x18xf32> -> vector<12x18xf32>
    %7 = arith.addf %4, %6 : vector<12x18xf32>
    %c0_6 = arith.constant 0 : index
    %c0_7 = arith.constant 0 : index
    %8 = vector.load %arg5[%c0_6, %c0_7] : memref<12x18xf32, #tpu.memory_space<vmem>>, vector<12x18xf32>
    tpu.vector_store %arg5[%c0_6, %c0_7], %7 {strides = array<i32>} : memref<12x18xf32, #tpu.memory_space<vmem>>, vector<12x18xf32>,
    %c0_i32_8 = arith.constant 0 : i32
    %9 = arith.cmpi eq, %arg1, %c0_i32_8 : i32
    %10 = arith.extui %9 : i1 to i32
    %c0_i32_9 = arith.constant 0 : i32
    %11 = arith.cmpi ne, %10, %c0_i32_9 : i32
    scf.if %11 {
      %c0_10 = arith.constant 0 : index
      %c0_11 = arith.constant 0 : index
      %12 = vector.load %arg5[%c0_10, %c0_11] : memref<12x18xf32, #tpu.memory_space<vmem>>, vector<12x18xf32>
      %c0_12 = arith.constant 0 : index
      %c0_13 = arith.constant 0 : index
      %13 = vector.load %arg4[%c0_12, %c0_13] : memref<12x18xf32, #tpu.memory_space<vmem>>, vector<12x18xf32>
      tpu.vector_store %arg4[%c0_12, %c0_13], %12 {strides = array<i32>} : memref<12x18xf32, #tpu.memory_space<vmem>>, vector<12x18xf32>,
    } else {
    }
    return
  }
  func.func @transform_0(%arg0: i32, %arg1: i32) -> (i32, i32) {
    %c0_i32 = arith.constant 0 : i32
    %c0_i32_0 = arith.constant 0 : i32
    return %c0_i32, %arg1 : i32, i32
  }
  func.func @transform_1(%arg0: i32, %arg1: i32) -> (i32, i32) {
    %c0_i32 = arith.constant 0 : i32
    return %arg1, %arg0 : i32, i32
  }
  func.func @transform_2(%arg0: i32, %arg1: i32) -> (i32, i32) {
    %c0_i32 = arith.constant 0 : i32
    %c0_i32_0 = arith.constant 0 : i32
    return %c0_i32, %arg0 : i32, i32
  }
}

module attributes {stable_mosaic.version = 11 : i64} {
  func.func @_spectral_mm_kernel(%arg0: i32, %arg1: memref<1x10x6xf32, #tpu.memory_space<vmem>>, %arg2: memref<1x6x40xf32, #tpu.memory_space<vmem>>, %arg3: memref<1x10x40xf32, #tpu.memory_space<vmem>>) attributes {dimension_semantics = [#tpu.dimension_semantics<parallel>], iteration_bounds = array<i64: 3>, scalar_prefetch = 0 : i64, scratch_operands = 0 : i64, tpu.core_type = #tpu.core_type<tc>, window_params = [{transform_indices = @transform_0, window_bounds = array<i64: 1, 10, 6>}, {transform_indices = @transform_1, window_bounds = array<i64: 1, 6, 40>}, {transform_indices = @transform_2, window_bounds = array<i64: 1, 10, 40>}]} {
    %c0 = arith.constant 0 : index
    %c0_0 = arith.constant 0 : index
    %c0_1 = arith.constant 0 : index
    %0 = vector.load %arg1[%c0, %c0_0, %c0_1] : memref<1x10x6xf32, #tpu.memory_space<vmem>>, vector<1x10x6xf32>
    %1 = vector.shape_cast %0 : vector<1x10x6xf32> to vector<10x6xf32>
    %c0_2 = arith.constant 0 : index
    %c0_3 = arith.constant 0 : index
    %c0_4 = arith.constant 0 : index
    %2 = vector.load %arg2[%c0_2, %c0_3, %c0_4] : memref<1x6x40xf32, #tpu.memory_space<vmem>>, vector<1x6x40xf32>
    %3 = vector.shape_cast %2 : vector<1x6x40xf32> to vector<6x40xf32>
    %cst = arith.constant dense<0.000000e+00> : vector<10x40xf32>
    %4 = tpu.matmul %1, %3, %cst {dimension_numbers = #tpu.dot_dimension_numbers<[1], [0], [0], [1], [0, 0, 1, 1], [], []>} : vector<10x6xf32>, vector<6x40xf32>, vector<10x40xf32> -> vector<10x40xf32>
    %c0_5 = arith.constant 0 : index
    %c0_6 = arith.constant 0 : index
    %c0_7 = arith.constant 0 : index
    %5 = vector.load %arg3[%c0_5, %c0_6, %c0_7] : memref<1x10x40xf32, #tpu.memory_space<vmem>>, vector<1x10x40xf32>
    %6 = vector.shape_cast %5 : vector<1x10x40xf32> to vector<10x40xf32>
    %7 = vector.shape_cast %4 : vector<10x40xf32> to vector<1x10x40xf32>
    tpu.vector_store %arg3[%c0_5, %c0_6, %c0_7], %7 {strides = array<i32>} : memref<1x10x40xf32, #tpu.memory_space<vmem>>, vector<1x10x40xf32>,
    return
  }
  func.func @transform_0(%arg0: i32) -> (i32, i32, i32) {
    %c0_i32 = arith.constant 0 : i32
    %c0_i32_0 = arith.constant 0 : i32
    %c0_i32_1 = arith.constant 0 : i32
    return %arg0, %c0_i32, %c0_i32_0 : i32, i32, i32
  }
  func.func @transform_1(%arg0: i32) -> (i32, i32, i32) {
    %c0_i32 = arith.constant 0 : i32
    %c0_i32_0 = arith.constant 0 : i32
    %c0_i32_1 = arith.constant 0 : i32
    return %arg0, %c0_i32, %c0_i32_0 : i32, i32, i32
  }
  func.func @transform_2(%arg0: i32) -> (i32, i32, i32) {
    %c0_i32 = arith.constant 0 : i32
    %c0_i32_0 = arith.constant 0 : i32
    %c0_i32_1 = arith.constant 0 : i32
    return %arg0, %c0_i32, %c0_i32_0 : i32, i32, i32
  }
}

module attributes {stable_mosaic.version = 11 : i64} {
  func.func @_mm_bias_act_kernel(%arg0: i32, %arg1: i32, %arg2: memref<8x70xf32, #tpu.memory_space<vmem>>, %arg3: memref<70x216xf32, #tpu.memory_space<vmem>>, %arg4: memref<8x1xf32, #tpu.memory_space<vmem>>, %arg5: memref<8x216xf32, #tpu.memory_space<vmem>>, %arg6: memref<8x216xf32, #tpu.memory_space<vmem>>) attributes {dimension_semantics = [#tpu.dimension_semantics<parallel>, #tpu.dimension_semantics<arbitrary>], iteration_bounds = array<i64: 1, 1>, scalar_prefetch = 0 : i64, scratch_operands = 1 : i64, tpu.core_type = #tpu.core_type<tc>, window_params = [{transform_indices = @transform_0, window_bounds = array<i64: 8, 70>}, {transform_indices = @transform_1, window_bounds = array<i64: 70, 216>}, {pipeline_mode = #tpu.pipeline_mode<synchronous>, transform_indices = @transform_2, window_bounds = array<i64: 8, 1>}, {transform_indices = @transform_3, window_bounds = array<i64: 8, 216>}]} {
    %c0_i32 = arith.constant 0 : i32
    %0 = arith.cmpi eq, %arg1, %c0_i32 : i32
    %1 = arith.extui %0 : i1 to i32
    %c0_i32_0 = arith.constant 0 : i32
    %2 = arith.cmpi ne, %1, %c0_i32_0 : i32
    scf.if %2 {
      %cst_10 = arith.constant 0.000000e+00 : f32
      %12 = vector.broadcast %cst_10 : f32 to vector<8x216xf32>
      %c0_11 = arith.constant 0 : index
      %c0_12 = arith.constant 0 : index
      %13 = vector.load %arg6[%c0_11, %c0_12] : memref<8x216xf32, #tpu.memory_space<vmem>>, vector<8x216xf32>
      tpu.vector_store %arg6[%c0_11, %c0_12], %12 {strides = array<i32>} : memref<8x216xf32, #tpu.memory_space<vmem>>, vector<8x216xf32>,
    } else {
    }
    %c0 = arith.constant 0 : index
    %c0_1 = arith.constant 0 : index
    %3 = vector.load %arg2[%c0, %c0_1] : memref<8x70xf32, #tpu.memory_space<vmem>>, vector<8x70xf32>
    %c0_2 = arith.constant 0 : index
    %c0_3 = arith.constant 0 : index
    %4 = vector.load %arg6[%c0_2, %c0_3] : memref<8x216xf32, #tpu.memory_space<vmem>>, vector<8x216xf32>
    %c0_4 = arith.constant 0 : index
    %c0_5 = arith.constant 0 : index
    %5 = vector.load %arg3[%c0_4, %c0_5] : memref<70x216xf32, #tpu.memory_space<vmem>>, vector<70x216xf32>
    %cst = arith.constant dense<0.000000e+00> : vector<8x216xf32>
    %6 = tpu.matmul %3, %5, %cst {dimension_numbers = #tpu.dot_dimension_numbers<[1], [0], [0], [1], [0, 0, 1, 1], [], []>} : vector<8x70xf32>, vector<70x216xf32>, vector<8x216xf32> -> vector<8x216xf32>
    %7 = arith.addf %4, %6 : vector<8x216xf32>
    %c0_6 = arith.constant 0 : index
    %c0_7 = arith.constant 0 : index
    %8 = vector.load %arg6[%c0_6, %c0_7] : memref<8x216xf32, #tpu.memory_space<vmem>>, vector<8x216xf32>
    tpu.vector_store %arg6[%c0_6, %c0_7], %7 {strides = array<i32>} : memref<8x216xf32, #tpu.memory_space<vmem>>, vector<8x216xf32>,
    %c0_i32_8 = arith.constant 0 : i32
    %9 = arith.cmpi eq, %arg1, %c0_i32_8 : i32
    %10 = arith.extui %9 : i1 to i32
    %c0_i32_9 = arith.constant 0 : i32
    %11 = arith.cmpi ne, %10, %c0_i32_9 : i32
    scf.if %11 {
      %c0_10 = arith.constant 0 : index
      %c0_11 = arith.constant 0 : index
      %12 = vector.load %arg6[%c0_10, %c0_11] : memref<8x216xf32, #tpu.memory_space<vmem>>, vector<8x216xf32>
      %c0_12 = arith.constant 0 : index
      %c0_13 = arith.constant 0 : index
      %13 = vector.load %arg4[%c0_12, %c0_13] : memref<8x1xf32, #tpu.memory_space<vmem>>, vector<8x1xf32>
      %14 = vector.broadcast %13 : vector<8x1xf32> to vector<8x216xf32>
      %15 = arith.addf %12, %14 : vector<8x216xf32>
      %c0_14 = arith.constant 0 : index
      %c0_15 = arith.constant 0 : index
      %16 = vector.load %arg5[%c0_14, %c0_15] : memref<8x216xf32, #tpu.memory_space<vmem>>, vector<8x216xf32>
      tpu.vector_store %arg5[%c0_14, %c0_15], %15 {strides = array<i32>} : memref<8x216xf32, #tpu.memory_space<vmem>>, vector<8x216xf32>,
    } else {
    }
    return
  }
  func.func @transform_0(%arg0: i32, %arg1: i32) -> (i32, i32) {
    %c0_i32 = arith.constant 0 : i32
    %c0_i32_0 = arith.constant 0 : i32
    return %c0_i32, %arg1 : i32, i32
  }
  func.func @transform_1(%arg0: i32, %arg1: i32) -> (i32, i32) {
    %c0_i32 = arith.constant 0 : i32
    return %arg1, %arg0 : i32, i32
  }
  func.func @transform_2(%arg0: i32, %arg1: i32) -> (i32, i32) {
    %c0_i32 = arith.constant 0 : i32
    %c0_i32_0 = arith.constant 0 : i32
    %c0_i32_1 = arith.constant 0 : i32
    return %c0_i32, %c0_i32_0 : i32, i32
  }
  func.func @transform_3(%arg0: i32, %arg1: i32) -> (i32, i32) {
    %c0_i32 = arith.constant 0 : i32
    %c0_i32_0 = arith.constant 0 : i32
    return %c0_i32, %arg0 : i32, i32
  }
}

module attributes {stable_mosaic.version = 11 : i64} {
  func.func @_mm_bias_act_kernel(%arg0: i32, %arg1: i32, %arg2: memref<8x216xf32, #tpu.memory_space<vmem>>, %arg3: memref<216x20xf32, #tpu.memory_space<vmem>>, %arg4: memref<8x20xf32, #tpu.memory_space<vmem>>, %arg5: memref<8x20xf32, #tpu.memory_space<vmem>>) attributes {dimension_semantics = [#tpu.dimension_semantics<parallel>, #tpu.dimension_semantics<arbitrary>], iteration_bounds = array<i64: 1, 1>, scalar_prefetch = 0 : i64, scratch_operands = 1 : i64, tpu.core_type = #tpu.core_type<tc>, window_params = [{transform_indices = @transform_0, window_bounds = array<i64: 8, 216>}, {transform_indices = @transform_1, window_bounds = array<i64: 216, 20>}, {transform_indices = @transform_2, window_bounds = array<i64: 8, 20>}]} {
    %c0_i32 = arith.constant 0 : i32
    %0 = arith.cmpi eq, %arg1, %c0_i32 : i32
    %1 = arith.extui %0 : i1 to i32
    %c0_i32_0 = arith.constant 0 : i32
    %2 = arith.cmpi ne, %1, %c0_i32_0 : i32
    scf.if %2 {
      %cst_12 = arith.constant 0.000000e+00 : f32
      %19 = vector.broadcast %cst_12 : f32 to vector<8x20xf32>
      %c0_13 = arith.constant 0 : index
      %c0_14 = arith.constant 0 : index
      %20 = vector.load %arg5[%c0_13, %c0_14] : memref<8x20xf32, #tpu.memory_space<vmem>>, vector<8x20xf32>
      tpu.vector_store %arg5[%c0_13, %c0_14], %19 {strides = array<i32>} : memref<8x20xf32, #tpu.memory_space<vmem>>, vector<8x20xf32>,
    } else {
    }
    %c0 = arith.constant 0 : index
    %c0_1 = arith.constant 0 : index
    %3 = vector.load %arg2[%c0, %c0_1] : memref<8x216xf32, #tpu.memory_space<vmem>>, vector<8x216xf32>
    %cst = arith.constant 2.000000e+01 : f32
    %4 = vector.broadcast %cst : f32 to vector<8x216xf32>
    %5 = arith.cmpf ogt, %3, %4 : vector<8x216xf32>
    %cst_2 = arith.constant 2.000000e+01 : f32
    %6 = vector.broadcast %cst_2 : f32 to vector<8x216xf32>
    %7 = arith.minimumf %3, %6 : vector<8x216xf32>
    %8 = math.exp %7 : vector<8x216xf32>
    %9 = math.log1p %8 : vector<8x216xf32>
    %10 = arith.select %5, %3, %9 : vector<8x216xi1>, vector<8x216xf32>
    %c0_3 = arith.constant 0 : index
    %c0_4 = arith.constant 0 : index
    %11 = vector.load %arg5[%c0_3, %c0_4] : memref<8x20xf32, #tpu.memory_space<vmem>>, vector<8x20xf32>
    %c0_5 = arith.constant 0 : index
    %c0_6 = arith.constant 0 : index
    %12 = vector.load %arg3[%c0_5, %c0_6] : memref<216x20xf32, #tpu.memory_space<vmem>>, vector<216x20xf32>
    %cst_7 = arith.constant dense<0.000000e+00> : vector<8x20xf32>
    %13 = tpu.matmul %10, %12, %cst_7 {dimension_numbers = #tpu.dot_dimension_numbers<[1], [0], [0], [1], [0, 0, 1, 1], [], []>} : vector<8x216xf32>, vector<216x20xf32>, vector<8x20xf32> -> vector<8x20xf32>
    %14 = arith.addf %11, %13 : vector<8x20xf32>
    %c0_8 = arith.constant 0 : index
    %c0_9 = arith.constant 0 : index
    %15 = vector.load %arg5[%c0_8, %c0_9] : memref<8x20xf32, #tpu.memory_space<vmem>>, vector<8x20xf32>
    tpu.vector_store %arg5[%c0_8, %c0_9], %14 {strides = array<i32>} : memref<8x20xf32, #tpu.memory_space<vmem>>, vector<8x20xf32>,
    %c0_i32_10 = arith.constant 0 : i32
    %16 = arith.cmpi eq, %arg1, %c0_i32_10 : i32
    %17 = arith.extui %16 : i1 to i32
    %c0_i32_11 = arith.constant 0 : i32
    %18 = arith.cmpi ne, %17, %c0_i32_11 : i32
    scf.if %18 {
      %c0_12 = arith.constant 0 : index
      %c0_13 = arith.constant 0 : index
      %19 = vector.load %arg5[%c0_12, %c0_13] : memref<8x20xf32, #tpu.memory_space<vmem>>, vector<8x20xf32>
      %c0_14 = arith.constant 0 : index
      %c0_15 = arith.constant 0 : index
      %20 = vector.load %arg4[%c0_14, %c0_15] : memref<8x20xf32, #tpu.memory_space<vmem>>, vector<8x20xf32>
      tpu.vector_store %arg4[%c0_14, %c0_15], %19 {strides = array<i32>} : memref<8x20xf32, #tpu.memory_space<vmem>>, vector<8x20xf32>,
    } else {
    }
    return
  }
  func.func @transform_0(%arg0: i32, %arg1: i32) -> (i32, i32) {
    %c0_i32 = arith.constant 0 : i32
    %c0_i32_0 = arith.constant 0 : i32
    return %c0_i32, %arg1 : i32, i32
  }
  func.func @transform_1(%arg0: i32, %arg1: i32) -> (i32, i32) {
    %c0_i32 = arith.constant 0 : i32
    return %arg1, %arg0 : i32, i32
  }
  func.func @transform_2(%arg0: i32, %arg1: i32) -> (i32, i32) {
    %c0_i32 = arith.constant 0 : i32
    %c0_i32_0 = arith.constant 0 : i32
    return %c0_i32, %arg0 : i32, i32
  }
}

module attributes {stable_mosaic.version = 11 : i64} {
  func.func @_mm_bias_act_kernel(%arg0: i32, %arg1: i32, %arg2: memref<20x6xf32, #tpu.memory_space<vmem>>, %arg3: memref<6x20xf32, #tpu.memory_space<vmem>>, %arg4: memref<20x20xf32, #tpu.memory_space<vmem>>, %arg5: memref<20x20xf32, #tpu.memory_space<vmem>>) attributes {dimension_semantics = [#tpu.dimension_semantics<parallel>, #tpu.dimension_semantics<arbitrary>], iteration_bounds = array<i64: 1, 1>, scalar_prefetch = 0 : i64, scratch_operands = 1 : i64, tpu.core_type = #tpu.core_type<tc>, window_params = [{transform_indices = @transform_0, window_bounds = array<i64: 20, 6>}, {transform_indices = @transform_1, window_bounds = array<i64: 6, 20>}, {transform_indices = @transform_2, window_bounds = array<i64: 20, 20>}]} {
    %c0_i32 = arith.constant 0 : i32
    %0 = arith.cmpi eq, %arg1, %c0_i32 : i32
    %1 = arith.extui %0 : i1 to i32
    %c0_i32_0 = arith.constant 0 : i32
    %2 = arith.cmpi ne, %1, %c0_i32_0 : i32
    scf.if %2 {
      %cst_10 = arith.constant 0.000000e+00 : f32
      %12 = vector.broadcast %cst_10 : f32 to vector<20x20xf32>
      %c0_11 = arith.constant 0 : index
      %c0_12 = arith.constant 0 : index
      %13 = vector.load %arg5[%c0_11, %c0_12] : memref<20x20xf32, #tpu.memory_space<vmem>>, vector<20x20xf32>
      tpu.vector_store %arg5[%c0_11, %c0_12], %12 {strides = array<i32>} : memref<20x20xf32, #tpu.memory_space<vmem>>, vector<20x20xf32>,
    } else {
    }
    %c0 = arith.constant 0 : index
    %c0_1 = arith.constant 0 : index
    %3 = vector.load %arg2[%c0, %c0_1] : memref<20x6xf32, #tpu.memory_space<vmem>>, vector<20x6xf32>
    %c0_2 = arith.constant 0 : index
    %c0_3 = arith.constant 0 : index
    %4 = vector.load %arg5[%c0_2, %c0_3] : memref<20x20xf32, #tpu.memory_space<vmem>>, vector<20x20xf32>
    %c0_4 = arith.constant 0 : index
    %c0_5 = arith.constant 0 : index
    %5 = vector.load %arg3[%c0_4, %c0_5] : memref<6x20xf32, #tpu.memory_space<vmem>>, vector<6x20xf32>
    %cst = arith.constant dense<0.000000e+00> : vector<20x20xf32>
    %6 = tpu.matmul %3, %5, %cst {dimension_numbers = #tpu.dot_dimension_numbers<[1], [0], [0], [1], [0, 0, 1, 1], [], []>} : vector<20x6xf32>, vector<6x20xf32>, vector<20x20xf32> -> vector<20x20xf32>
    %7 = arith.addf %4, %6 : vector<20x20xf32>
    %c0_6 = arith.constant 0 : index
    %c0_7 = arith.constant 0 : index
    %8 = vector.load %arg5[%c0_6, %c0_7] : memref<20x20xf32, #tpu.memory_space<vmem>>, vector<20x20xf32>
    tpu.vector_store %arg5[%c0_6, %c0_7], %7 {strides = array<i32>} : memref<20x20xf32, #tpu.memory_space<vmem>>, vector<20x20xf32>,
    %c0_i32_8 = arith.constant 0 : i32
    %9 = arith.cmpi eq, %arg1, %c0_i32_8 : i32
    %10 = arith.extui %9 : i1 to i32
    %c0_i32_9 = arith.constant 0 : i32
    %11 = arith.cmpi ne, %10, %c0_i32_9 : i32
    scf.if %11 {
      %c0_10 = arith.constant 0 : index
      %c0_11 = arith.constant 0 : index
      %12 = vector.load %arg5[%c0_10, %c0_11] : memref<20x20xf32, #tpu.memory_space<vmem>>, vector<20x20xf32>
      %c0_12 = arith.constant 0 : index
      %c0_13 = arith.constant 0 : index
      %13 = vector.load %arg4[%c0_12, %c0_13] : memref<20x20xf32, #tpu.memory_space<vmem>>, vector<20x20xf32>
      tpu.vector_store %arg4[%c0_12, %c0_13], %12 {strides = array<i32>} : memref<20x20xf32, #tpu.memory_space<vmem>>, vector<20x20xf32>,
    } else {
    }
    return
  }
  func.func @transform_0(%arg0: i32, %arg1: i32) -> (i32, i32) {
    %c0_i32 = arith.constant 0 : i32
    %c0_i32_0 = arith.constant 0 : i32
    return %c0_i32, %arg1 : i32, i32
  }
  func.func @transform_1(%arg0: i32, %arg1: i32) -> (i32, i32) {
    %c0_i32 = arith.constant 0 : i32
    return %arg1, %arg0 : i32, i32
  }
  func.func @transform_2(%arg0: i32, %arg1: i32) -> (i32, i32) {
    %c0_i32 = arith.constant 0 : i32
    %c0_i32_0 = arith.constant 0 : i32
    return %c0_i32, %arg0 : i32, i32
  }
}

module attributes {stable_mosaic.version = 11 : i64} {
  func.func @_spectral_mm_kernel(%arg0: i32, %arg1: memref<1x6x24xf32, #tpu.memory_space<vmem>>, %arg2: memref<1x24x30xf32, #tpu.memory_space<vmem>>, %arg3: memref<1x6x30xf32, #tpu.memory_space<vmem>>) attributes {dimension_semantics = [#tpu.dimension_semantics<parallel>], iteration_bounds = array<i64: 2>, scalar_prefetch = 0 : i64, scratch_operands = 0 : i64, tpu.core_type = #tpu.core_type<tc>, window_params = [{transform_indices = @transform_0, window_bounds = array<i64: 1, 6, 24>}, {transform_indices = @transform_1, window_bounds = array<i64: 1, 24, 30>}, {transform_indices = @transform_2, window_bounds = array<i64: 1, 6, 30>}]} {
    %c0 = arith.constant 0 : index
    %c0_0 = arith.constant 0 : index
    %c0_1 = arith.constant 0 : index
    %0 = vector.load %arg1[%c0, %c0_0, %c0_1] : memref<1x6x24xf32, #tpu.memory_space<vmem>>, vector<1x6x24xf32>
    %1 = vector.shape_cast %0 : vector<1x6x24xf32> to vector<6x24xf32>
    %c0_2 = arith.constant 0 : index
    %c0_3 = arith.constant 0 : index
    %c0_4 = arith.constant 0 : index
    %2 = vector.load %arg2[%c0_2, %c0_3, %c0_4] : memref<1x24x30xf32, #tpu.memory_space<vmem>>, vector<1x24x30xf32>
    %3 = vector.shape_cast %2 : vector<1x24x30xf32> to vector<24x30xf32>
    %cst = arith.constant dense<0.000000e+00> : vector<6x30xf32>
    %4 = tpu.matmul %1, %3, %cst {dimension_numbers = #tpu.dot_dimension_numbers<[1], [0], [0], [1], [0, 0, 1, 1], [], []>} : vector<6x24xf32>, vector<24x30xf32>, vector<6x30xf32> -> vector<6x30xf32>
    %c0_5 = arith.constant 0 : index
    %c0_6 = arith.constant 0 : index
    %c0_7 = arith.constant 0 : index
    %5 = vector.load %arg3[%c0_5, %c0_6, %c0_7] : memref<1x6x30xf32, #tpu.memory_space<vmem>>, vector<1x6x30xf32>
    %6 = vector.shape_cast %5 : vector<1x6x30xf32> to vector<6x30xf32>
    %7 = vector.shape_cast %4 : vector<6x30xf32> to vector<1x6x30xf32>
    tpu.vector_store %arg3[%c0_5, %c0_6, %c0_7], %7 {strides = array<i32>} : memref<1x6x30xf32, #tpu.memory_space<vmem>>, vector<1x6x30xf32>,
    return
  }
  func.func @transform_0(%arg0: i32) -> (i32, i32, i32) {
    %c0_i32 = arith.constant 0 : i32
    %c0_i32_0 = arith.constant 0 : i32
    %c0_i32_1 = arith.constant 0 : i32
    return %arg0, %c0_i32, %c0_i32_0 : i32, i32, i32
  }
  func.func @transform_1(%arg0: i32) -> (i32, i32, i32) {
    %c0_i32 = arith.constant 0 : i32
    %c0_i32_0 = arith.constant 0 : i32
    %c0_i32_1 = arith.constant 0 : i32
    return %arg0, %c0_i32, %c0_i32_0 : i32, i32, i32
  }
  func.func @transform_2(%arg0: i32) -> (i32, i32, i32) {
    %c0_i32 = arith.constant 0 : i32
    %c0_i32_0 = arith.constant 0 : i32
    %c0_i32_1 = arith.constant 0 : i32
    return %arg0, %c0_i32, %c0_i32_0 : i32, i32, i32
  }
}

module attributes {stable_mosaic.version = 11 : i64} {
  func.func @_mm_bias_act_kernel(%arg0: i32, %arg1: i32, %arg2: memref<10x20xf32, #tpu.memory_space<vmem>>, %arg3: memref<20x64xf32, #tpu.memory_space<vmem>>, %arg4: memref<10x1xf32, #tpu.memory_space<vmem>>, %arg5: memref<10x64xf32, #tpu.memory_space<vmem>>, %arg6: memref<10x64xf32, #tpu.memory_space<vmem>>) attributes {dimension_semantics = [#tpu.dimension_semantics<parallel>, #tpu.dimension_semantics<arbitrary>], iteration_bounds = array<i64: 1, 1>, scalar_prefetch = 0 : i64, scratch_operands = 1 : i64, tpu.core_type = #tpu.core_type<tc>, window_params = [{transform_indices = @transform_0, window_bounds = array<i64: 10, 20>}, {transform_indices = @transform_1, window_bounds = array<i64: 20, 64>}, {pipeline_mode = #tpu.pipeline_mode<synchronous>, transform_indices = @transform_2, window_bounds = array<i64: 10, 1>}, {transform_indices = @transform_3, window_bounds = array<i64: 10, 64>}]} {
    %c0_i32 = arith.constant 0 : i32
    %0 = arith.cmpi eq, %arg1, %c0_i32 : i32
    %1 = arith.extui %0 : i1 to i32
    %c0_i32_0 = arith.constant 0 : i32
    %2 = arith.cmpi ne, %1, %c0_i32_0 : i32
    scf.if %2 {
      %cst_10 = arith.constant 0.000000e+00 : f32
      %12 = vector.broadcast %cst_10 : f32 to vector<10x64xf32>
      %c0_11 = arith.constant 0 : index
      %c0_12 = arith.constant 0 : index
      %13 = vector.load %arg6[%c0_11, %c0_12] : memref<10x64xf32, #tpu.memory_space<vmem>>, vector<10x64xf32>
      tpu.vector_store %arg6[%c0_11, %c0_12], %12 {strides = array<i32>} : memref<10x64xf32, #tpu.memory_space<vmem>>, vector<10x64xf32>,
    } else {
    }
    %c0 = arith.constant 0 : index
    %c0_1 = arith.constant 0 : index
    %3 = vector.load %arg2[%c0, %c0_1] : memref<10x20xf32, #tpu.memory_space<vmem>>, vector<10x20xf32>
    %c0_2 = arith.constant 0 : index
    %c0_3 = arith.constant 0 : index
    %4 = vector.load %arg6[%c0_2, %c0_3] : memref<10x64xf32, #tpu.memory_space<vmem>>, vector<10x64xf32>
    %c0_4 = arith.constant 0 : index
    %c0_5 = arith.constant 0 : index
    %5 = vector.load %arg3[%c0_4, %c0_5] : memref<20x64xf32, #tpu.memory_space<vmem>>, vector<20x64xf32>
    %cst = arith.constant dense<0.000000e+00> : vector<10x64xf32>
    %6 = tpu.matmul %3, %5, %cst {dimension_numbers = #tpu.dot_dimension_numbers<[1], [0], [0], [1], [0, 0, 1, 1], [], []>} : vector<10x20xf32>, vector<20x64xf32>, vector<10x64xf32> -> vector<10x64xf32>
    %7 = arith.addf %4, %6 : vector<10x64xf32>
    %c0_6 = arith.constant 0 : index
    %c0_7 = arith.constant 0 : index
    %8 = vector.load %arg6[%c0_6, %c0_7] : memref<10x64xf32, #tpu.memory_space<vmem>>, vector<10x64xf32>
    tpu.vector_store %arg6[%c0_6, %c0_7], %7 {strides = array<i32>} : memref<10x64xf32, #tpu.memory_space<vmem>>, vector<10x64xf32>,
    %c0_i32_8 = arith.constant 0 : i32
    %9 = arith.cmpi eq, %arg1, %c0_i32_8 : i32
    %10 = arith.extui %9 : i1 to i32
    %c0_i32_9 = arith.constant 0 : i32
    %11 = arith.cmpi ne, %10, %c0_i32_9 : i32
    scf.if %11 {
      %c0_10 = arith.constant 0 : index
      %c0_11 = arith.constant 0 : index
      %12 = vector.load %arg6[%c0_10, %c0_11] : memref<10x64xf32, #tpu.memory_space<vmem>>, vector<10x64xf32>
      %c0_12 = arith.constant 0 : index
      %c0_13 = arith.constant 0 : index
      %13 = vector.load %arg4[%c0_12, %c0_13] : memref<10x1xf32, #tpu.memory_space<vmem>>, vector<10x1xf32>
      %14 = vector.broadcast %13 : vector<10x1xf32> to vector<10x64xf32>
      %15 = arith.addf %12, %14 : vector<10x64xf32>
      %c0_14 = arith.constant 0 : index
      %c0_15 = arith.constant 0 : index
      %16 = vector.load %arg5[%c0_14, %c0_15] : memref<10x64xf32, #tpu.memory_space<vmem>>, vector<10x64xf32>
      tpu.vector_store %arg5[%c0_14, %c0_15], %15 {strides = array<i32>} : memref<10x64xf32, #tpu.memory_space<vmem>>, vector<10x64xf32>,
    } else {
    }
    return
  }
  func.func @transform_0(%arg0: i32, %arg1: i32) -> (i32, i32) {
    %c0_i32 = arith.constant 0 : i32
    %c0_i32_0 = arith.constant 0 : i32
    return %c0_i32, %arg1 : i32, i32
  }
  func.func @transform_1(%arg0: i32, %arg1: i32) -> (i32, i32) {
    %c0_i32 = arith.constant 0 : i32
    return %arg1, %arg0 : i32, i32
  }
  func.func @transform_2(%arg0: i32, %arg1: i32) -> (i32, i32) {
    %c0_i32 = arith.constant 0 : i32
    %c0_i32_0 = arith.constant 0 : i32
    %c0_i32_1 = arith.constant 0 : i32
    return %c0_i32, %c0_i32_0 : i32, i32
  }
  func.func @transform_3(%arg0: i32, %arg1: i32) -> (i32, i32) {
    %c0_i32 = arith.constant 0 : i32
    %c0_i32_0 = arith.constant 0 : i32
    return %c0_i32, %arg0 : i32, i32
  }
}

</mosaic_0001>

<llo_original>
// kernel: neg.2
$region0: #{neg.2}
  #allocation0 [shape = 's32[1]{0}', space=sflag, size = 0x4, scoped, tag = 'scoped memory for neg.2']
  %s0 = inlined_call_operand.vmem [shape: f32[216], index: 0, kind: input, shape index: {}]
  %s1 = inlined_call_operand.vmem [shape: f32[216], index: 1, kind: output, shape index: {}]
  %v2 = vld [vmem:[%s0] sm:$0x3]
  %3 = xla_tuple %v2
  %4 = xla_tuple %3
  %v5 = vxor.u32 %v2, 2147483648
  %6 = xla_tuple %v5
  %7 = vst [vmem:[%s1] sm:$0x3] %v5

// kernel: s2cnn_equators_forward.8
$region0: #{s2cnn_equators_forward.8}
  #allocation0 [shape = 'u32[]', space=smem, size = 0x4, offset = 0x4, fixed_abs, tag = 'smem constant byte address 0x4 - core index']
  #allocation1 [shape = 'u32[144,128]{1,0:T(1,128)}', space=vmem, size = 0x12000, scoped, tag = 'internal scratch']
  #allocation2 [shape = 'f32[6,18]{1,0:T(8,128)}', space=vmem, size = 0x1000, scoped, tag = 'scratch operand']
  %s0 = inlined_call_operand.vmem [shape: f32[6,64], index: 0, kind: input, shape index: {}]
  %s1 = inlined_call_operand.vmem [shape: f32[64,18], index: 1, kind: input, shape index: {}]
  %s2 = inlined_call_operand.vmem [shape: f32[6,18], index: 2, kind: output, shape index: {}]
  %s3 = sld [smem:[#allocation0]]
  $region26: #{s2cnn_equators_forward.8} parent=0
    _
  %s5 = ssub.s32 1, %s3
  %s6 = scalar_select 0, %s5, %s3
  // Predicated region
  $region2: #{s2cnn_equators_forward.8} parent=0 // pred_check
    _
  $region3: #{s2cnn_equators_forward.8} parent=0 // pred_check_branch
    %8 = sbr.rel (0) target = $region5
  $region4: #{s2cnn_equators_forward.8} parent=0 // pred_region
    _
  $region5: #{s2cnn_equators_forward.8} parent=0 // pred_fallthru
    _
  // Predicated region
  $region6: #{s2cnn_equators_forward.8} parent=0 // pred_check
    _
  $region7: #{s2cnn_equators_forward.8} parent=0 // pred_check_branch
    %10 = sbr.rel (0) target = $region9
  $region8: #{s2cnn_equators_forward.8} parent=0 // pred_region
    _
  $region9: #{s2cnn_equators_forward.8} parent=0 // pred_fallthru
    _
  %p11 = scmp.eq.s32.totalorder 0, 0
  // Predicated region
  $region10: #{s2cnn_equators_forward.8} parent=0 // pred_check
    %p12 = pneg %p11
  $region11: #{s2cnn_equators_forward.8} parent=0 // pred_check_branch
    %14 = sbr.rel (%p12) target = $region13
  $region12: #{s2cnn_equators_forward.8} parent=0 // pred_region
    %vm15 = vcmask 144384
    %16 = vst.msk [vmem:[#allocation2] sm:$0x3f] %vm15, 0.0
  $region13: #{s2cnn_equators_forward.8} parent=0 // pred_fallthru
    _
  %v17 = vld [vmem:[%s0] sm:$0x3f]
  %v18 = vld [vmem:[#allocation2] sm:$0x3f]
  %v19 = vld [vmem:[%s1] sm:$0xff]
  %v20 = vld [vmem:[%s1 + $0x8] sm:$0xff]
  %v21 = vld [vmem:[%s1 + $0x10] sm:$0xff]
  %v22 = vld [vmem:[%s1 + $0x18] sm:$0xff]
  %v23 = vld [vmem:[%s1 + $0x20] sm:$0xff]
  %v24 = vld [vmem:[%s1 + $0x28] sm:$0xff]
  %v25 = vld [vmem:[%s1 + $0x30] sm:$0xff]
  %v26 = vld [vmem:[%s1 + $0x38] sm:$0xff]
  %vm27 = vcmask 523264
  %v29 = vsel %vm27, %v17, 0
  %31 = vmatprep.subr.mxu0 0.0
  %32 = vmatpush1.msra.mxu0 0.0
  %33 = vmatprep.subr.mxu0 0.0
  %34 = vmatpush1.msra.mxu0 0.0
  %35 = vmatprep.subr.mxu0 0.0
  %36 = vmatpush1.msra.mxu0 0.0
  %37 = vmatprep.subr.mxu0 0.0
  %38 = vmatpush1.msra.mxu0 0.0
  %39 = vmatprep.subr.mxu0 0.0
  %40 = vmatpush1.msra.mxu0 0.0
  %41 = vmatprep.subr.mxu0 0.0
  %42 = vmatpush1.msra.mxu0 0.0
  %43 = vmatprep.subr.mxu0 0.0
  %44 = vmatpush1.msra.mxu0 0.0
  %45 = vmatprep.subr.mxu0 0.0
  %46 = vmatpush1.msra.mxu0 0.0
  %47 = vmatprep.subr.mxu0 0.0
  %48 = vmatpush1.msra.mxu0 %v26
  %49 = vmatprep.subr.mxu0 0.0
  %50 = vmatpush1.msra.mxu0 %v25
  %51 = vmatprep.subr.mxu0 0.0
  %52 = vmatpush1.msra.mxu0 %v24
  %53 = vmatprep.subr.mxu0 0.0
  %54 = vmatpush1.msra.mxu0 %v23
  %55 = vmatprep.subr.mxu0 0.0
  %56 = vmatpush1.msra.mxu0 %v22
  %57 = vmatprep.subr.mxu0 0.0
  %58 = vmatpush1.msra.mxu0 %v21
  %59 = vmatprep.subr.mxu0 0.0
  %60 = vmatpush1.msra.mxu0 %v20
  %61 = vmatprep.subr.mxu0 0.0
  %62 = vmatpush1.msra.mxu0 %v19
  %63 = vmatprep.subr.mxu0 0.0
  %64 = vmatpush2.msra.mxu0 0.0
  %65 = vmatprep.subr.mxu0 0.0
  %66 = vmatpush2.msra.mxu0 0.0
  %67 = vmatprep.subr.mxu0 0.0
  %68 = vmatpush2.msra.mxu0 0.0
  %69 = vmatprep.subr.mxu0 0.0
  %70 = vmatpush2.msra.mxu0 0.0
  %71 = vmatprep.subr.mxu0 0.0
  %72 = vmatpush2.msra.mxu0 0.0
  %73 = vmatprep.subr.mxu0 0.0
  %74 = vmatpush2.msra.mxu0 0.0
  %75 = vmatprep.subr.mxu0 0.0
  %76 = vmatpush2.msra.mxu0 0.0
  %77 = vmatprep.subr.mxu0 0.0
  %78 = vmatpush2.msra.mxu0 0.0
  %79 = vmatprep.subr.mxu0 0.0
  %80 = vmatpush2.msra.mxu0 0.0
  %81 = vmatprep.subr.mxu0 0.0
  %82 = vmatpush2.msra.mxu0 0.0
  %83 = vmatprep.subr.mxu0 0.0
  %84 = vmatpush2.msra.mxu0 0.0
  %85 = vmatprep.subr.mxu0 0.0
  %86 = vmatpush2.msra.mxu0 0.0
  %87 = vmatprep.subr.mxu0 0.0
  %88 = vmatpush2.msra.mxu0 0.0
  %89 = vmatprep.subr.mxu0 0.0
  %90 = vmatpush2.msra.mxu0 0.0
  %91 = vmatprep.subr.mxu0 0.0
  %92 = vmatpush2.msra.mxu0 0.0
  %93 = vmatprep.subr.mxu0 0.0
  %94 = vmatpush2.msra.mxu0 0.0
  %95 = vmatprep.mubr.f32.mxu0 0.0
  %96 = vmatmul.mubr.f32.gmra.mxu0 %v29
  %v97 = vpop.f32.mrf.mxu0
  %v98 = vadd.f32 0.0, %v97
  %v99 = vpop.f32.mrf.mxu0
  %100 = vdwg.mxu0
  %v101 = vadd.f32 %v18, %v98
  %vm102 = vcmask 144384
  %103 = vst.msk [vmem:[#allocation2] sm:$0x3f] %vm102, %v101
  // Predicated region
  $region14: #{s2cnn_equators_forward.8} parent=0 // pred_check
    %p104 = pneg %p11
  $region15: #{s2cnn_equators_forward.8} parent=0 // pred_check_branch
    %106 = sbr.rel (%p104) target = $region17
  $region16: #{s2cnn_equators_forward.8} parent=0 // pred_region
    %v107 = vld [vmem:[#allocation2] sm:$0x3f]
    %108 = vst.msk [vmem:[%s2] sm:$0x3f] %vm102, %v107
  $region17: #{s2cnn_equators_forward.8} parent=0 // pred_fallthru
    _
  // Predicated region
  $region18: #{s2cnn_equators_forward.8} parent=0 // pred_check
    _
  $region19: #{s2cnn_equators_forward.8} parent=0 // pred_check_branch
    %110 = sbr.rel (0) target = $region21
  $region20: #{s2cnn_equators_forward.8} parent=0 // pred_region
    _
  $region21: #{s2cnn_equators_forward.8} parent=0 // pred_fallthru
    _
  // Predicated region
  $region22: #{s2cnn_equators_forward.8} parent=0 // pred_check
    _
  $region23: #{s2cnn_equators_forward.8} parent=0 // pred_check_branch
    %112 = sbr.rel (0) target = $region25
  $region24: #{s2cnn_equators_forward.8} parent=0 // pred_region
    _
  $region25: #{s2cnn_equators_forward.8} parent=0 // pred_fallthru
    _

// kernel: s2cnn_equators_forward.9
$region0: #{s2cnn_equators_forward.9}
  #allocation0 [shape = 'u32[]', space=smem, size = 0x4, offset = 0x4, fixed_abs, tag = 'smem constant byte address 0x4 - core index']
  #allocation1 [shape = 'u32[144,128]{1,0:T(1,128)}', space=vmem, size = 0x12000, scoped, tag = 'internal scratch']
  #allocation2 [shape = 'f32[12,18]{1,0:T(8,128)}', space=vmem, size = 0x2000, scoped, tag = 'scratch operand']
  %s0 = inlined_call_operand.vmem [shape: f32[12,8], index: 0, kind: input, shape index: {}]
  %s1 = inlined_call_operand.vmem [shape: f32[8,18], index: 1, kind: input, shape index: {}]
  %s2 = inlined_call_operand.vmem [shape: f32[12,18], index: 2, kind: output, shape index: {}]
  %s3 = sld [smem:[#allocation0]]
  $region26: #{s2cnn_equators_forward.9} parent=0
    _
  %s5 = ssub.s32 1, %s3
  %s6 = scalar_select 0, %s5, %s3
  // Predicated region
  $region2: #{s2cnn_equators_forward.9} parent=0 // pred_check
    _
  $region3: #{s2cnn_equators_forward.9} parent=0 // pred_check_branch
    %8 = sbr.rel (0) target = $region5
  $region4: #{s2cnn_equators_forward.9} parent=0 // pred_region
    _
  $region5: #{s2cnn_equators_forward.9} parent=0 // pred_fallthru
    _
  // Predicated region
  $region6: #{s2cnn_equators_forward.9} parent=0 // pred_check
    _
  $region7: #{s2cnn_equators_forward.9} parent=0 // pred_check_branch
    %10 = sbr.rel (0) target = $region9
  $region8: #{s2cnn_equators_forward.9} parent=0 // pred_region
    _
  $region9: #{s2cnn_equators_forward.9} parent=0 // pred_fallthru
    _
  %p11 = scmp.eq.s32.totalorder 0, 0
  // Predicated region
  $region10: #{s2cnn_equators_forward.9} parent=0 // pred_check
    %p12 = pneg %p11
  $region11: #{s2cnn_equators_forward.9} parent=0 // pred_check_branch
    %14 = sbr.rel (%p12) target = $region13
  $region12: #{s2cnn_equators_forward.9} parent=0 // pred_region
    %vm15 = vcmask 146432
    %16 = vst.msk [vmem:[#allocation2] sm:$0xff] %vm15, 0.0
    %vm17 = vcmask 142336
    %18 = vst.msk [vmem:[#allocation2 + $0x8] sm:$0xf] %vm17, 0.0
  $region13: #{s2cnn_equators_forward.9} parent=0 // pred_fallthru
    _
  %v19 = vld [vmem:[%s0] sm:$0xff]
  %v20 = vld [vmem:[%s0 + $0x8] sm:$0xf]
  %v21 = vld [vmem:[#allocation2] sm:$0xff]
  %v22 = vld [vmem:[#allocation2 + $0x8] sm:$0xf]
  %v23 = vld [vmem:[%s1] sm:$0xff]
  %vm24 = vcmask 64512
  %v26 = vsel %vm24, %v19, 0
  %v29 = vsel %vm24, %v20, 0
  %31 = vmatprep.subr.mxu0 0.0
  %32 = vmatpush1.msra.mxu0 0.0
  %33 = vmatprep.subr.mxu0 0.0
  %34 = vmatpush1.msra.mxu0 0.0
  %35 = vmatprep.subr.mxu0 0.0
  %36 = vmatpush1.msra.mxu0 0.0
  %37 = vmatprep.subr.mxu0 0.0
  %38 = vmatpush1.msra.mxu0 0.0
  %39 = vmatprep.subr.mxu0 0.0
  %40 = vmatpush1.msra.mxu0 0.0
  %41 = vmatprep.subr.mxu0 0.0
  %42 = vmatpush1.msra.mxu0 0.0
  %43 = vmatprep.subr.mxu0 0.0
  %44 = vmatpush1.msra.mxu0 0.0
  %45 = vmatprep.subr.mxu0 0.0
  %46 = vmatpush1.msra.mxu0 0.0
  %47 = vmatprep.subr.mxu0 0.0
  %48 = vmatpush1.msra.mxu0 0.0
  %49 = vmatprep.subr.mxu0 0.0
  %50 = vmatpush1.msra.mxu0 0.0
  %51 = vmatprep.subr.mxu0 0.0
  %52 = vmatpush1.msra.mxu0 0.0
  %53 = vmatprep.subr.mxu0 0.0
  %54 = vmatpush1.msra.mxu0 0.0
  %55 = vmatprep.subr.mxu0 0.0
  %56 = vmatpush1.msra.mxu0 0.0
  %57 = vmatprep.subr.mxu0 0.0
  %58 = vmatpush1.msra.mxu0 0.0
  %59 = vmatprep.subr.mxu0 0.0
  %60 = vmatpush1.msra.mxu0 0.0
  %61 = vmatprep.subr.mxu0 0.0
  %62 = vmatpush1.msra.mxu0 %v23
  %63 = vmatprep.subr.mxu0 0.0
  %64 = vmatpush2.msra.mxu0 0.0
  %65 = vmatprep.subr.mxu0 0.0
  %66 = vmatpush2.msra.mxu0 0.0
  %67 = vmatprep.subr.mxu0 0.0
  %68 = vmatpush2.msra.mxu0 0.0
  %69 = vmatprep.subr.mxu0 0.0
  %70 = vmatpush2.msra.mxu0 0.0
  %71 = vmatprep.subr.mxu0 0.0
  %72 = vmatpush2.msra.mxu0 0.0
  %73 = vmatprep.subr.mxu0 0.0
  %74 = vmatpush2.msra.mxu0 0.0
  %75 = vmatprep.subr.mxu0 0.0
  %76 = vmatpush2.msra.mxu0 0.0
  %77 = vmatprep.subr.mxu0 0.0
  %78 = vmatpush2.msra.mxu0 0.0
  %79 = vmatprep.subr.mxu0 0.0
  %80 = vmatpush2.msra.mxu0 0.0
  %81 = vmatprep.subr.mxu0 0.0
  %82 = vmatpush2.msra.mxu0 0.0
  %83 = vmatprep.subr.mxu0 0.0
  %84 = vmatpush2.msra.mxu0 0.0
  %85 = vmatprep.subr.mxu0 0.0
  %86 = vmatpush2.msra.mxu0 0.0
  %87 = vmatprep.subr.mxu0 0.0
  %88 = vmatpush2.msra.mxu0 0.0
  %89 = vmatprep.subr.mxu0 0.0
  %90 = vmatpush2.msra.mxu0 0.0
  %91 = vmatprep.subr.mxu0 0.0
  %92 = vmatpush2.msra.mxu0 0.0
  %93 = vmatprep.subr.mxu0 0.0
  %94 = vmatpush2.msra.mxu0 0.0
  %95 = vmatprep.mubr.f32.mxu0 0.0
  %96 = vmatmul.mubr.f32.gmra.mxu0 %v26
  %v97 = vpop.f32.mrf.mxu0
  %v98 = vadd.f32 0.0, %v97
  %v99 = vpop.f32.mrf.mxu0
  %100 = vmatprep.mubr.f32.mxu0 0.0
  %101 = vmatmul.mubr.f32.gmra.mxu0 %v29
  %v102 = vpop.f32.mrf.mxu0
  %v103 = vadd.f32 0.0, %v102
  %v104 = vpop.f32.mrf.mxu0
  %105 = vdwg.mxu0
  %v106 = vadd.f32 %v21, %v98
  %v107 = vadd.f32 %v22, %v103
  %vm108 = vcmask 146432
  %109 = vst.msk [vmem:[#allocation2] sm:$0xff] %vm108, %v106
  %vm110 = vcmask 142336
  %111 = vst.msk [vmem:[#allocation2 + $0x8] sm:$0xf] %vm110, %v107
  // Predicated region
  $region14: #{s2cnn_equators_forward.9} parent=0 // pred_check
    %p112 = pneg %p11
  $region15: #{s2cnn_equators_forward.9} parent=0 // pred_check_branch
    %114 = sbr.rel (%p112) target = $region17
  $region16: #{s2cnn_equators_forward.9} parent=0 // pred_region
    %v115 = vld [vmem:[#allocation2] sm:$0xff]
    %v116 = vld [vmem:[#allocation2 + $0x8] sm:$0xf]
    %117 = vst.msk [vmem:[%s2] sm:$0xff] %vm108, %v115
    %118 = vst.msk [vmem:[%s2 + $0x8] sm:$0xf] %vm110, %v116
  $region17: #{s2cnn_equators_forward.9} parent=0 // pred_fallthru
    _
  // Predicated region
  $region18: #{s2cnn_equators_forward.9} parent=0 // pred_check
    _
  $region19: #{s2cnn_equators_forward.9} parent=0 // pred_check_branch
    %120 = sbr.rel (0) target = $region21
  $region20: #{s2cnn_equators_forward.9} parent=0 // pred_region
    _
  $region21: #{s2cnn_equators_forward.9} parent=0 // pred_fallthru
    _
  // Predicated region
  $region22: #{s2cnn_equators_forward.9} parent=0 // pred_check
    _
  $region23: #{s2cnn_equators_forward.9} parent=0 // pred_check_branch
    %122 = sbr.rel (0) target = $region25
  $region24: #{s2cnn_equators_forward.9} parent=0 // pred_region
    _
  $region25: #{s2cnn_equators_forward.9} parent=0 // pred_fallthru
    _

// kernel: s2cnn_equators_forward.10
$region0: #{s2cnn_equators_forward.10}
  #allocation0 [shape = 'u32[]', space=smem, size = 0x4, offset = 0x4, fixed_abs, tag = 'smem constant byte address 0x4 - core index']
  #allocation1 [shape = 'u32[144,128]{1,0:T(1,128)}', space=vmem, size = 0x12000, scoped, tag = 'internal scratch']
  %s0 = inlined_call_operand.vmem [shape: f32[3,10,6], index: 0, kind: input, shape index: {}]
  %s1 = inlined_call_operand.vmem [shape: f32[3,6,40], index: 1, kind: input, shape index: {}]
  %s2 = inlined_call_operand.vmem [shape: f32[3,10,40], index: 2, kind: output, shape index: {}]
  %s3 = sld [smem:[#allocation0]]
  $region41: #{s2cnn_equators_forward.10} parent=0
    _
  %s5 = ssub.s32 1, %s3
  %s6 = scalar_select 0, %s5, %s3
  loop: start=0, step=1, limit=5
  $region2: #{s2cnn_equators_forward.10} parent=0 // loop_pre_header
    _
  $region3: #{s2cnn_equators_forward.10} parent=0 // loop_header
    %s8 = sphi 0, %s12
    %p9 = scmp.ge.s32.totalorder %s8, 5
    %s18 = sphi 0, %s20
    %s21 = sphi 0, %s18
    %s22 = sphi 0, %s21
    %s38 = sphi 0, %s22
    %s44 = sphi 0, %s46
    %s47 = sphi 0, %s44
    %s48 = sphi 0, %s47
    %s64 = sphi 0, %s48
    %s70 = sphi 0, %s72
    %s73 = sphi 0, %s70
    %s74 = sphi 0, %s73
    %s90 = sphi 0, %s74
  $region4: #{s2cnn_equators_forward.10} parent=0 // loop_header_branch
    %11 = sbr.rel (%p9) target = $region8
  $region5: #{s2cnn_equators_forward.10} parent=0 // loop_body
    %s13 = ssub.s32 %s8, 1
    %s14 = ssub.s32 %s8, 2
    %s15 = sadd.s32 %s8, 1
    %s16 = ssub.s32 %s8, %s15
    %p17 = scmp.eq.s32.totalorder %s16, 0
    %s19 = sadd.s32 %s18, 1
    %s20 = scalar_select %p17, %s18, %s19
    %p23 = pneg %p17
    %p24 = scmp.eq.s32.totalorder %s8, 2
    %p25 = por %p23, %p24
    %p26 = scmp.ne.s32.totalorder %s18, %s21
    %p27 = scmp.eq.s32.totalorder %s8, 0
    %p28 = por %p26, %p27
    %p29 = scmp.ne.s32.totalorder %s18, %s21
    %p30 = scmp.eq.s32.totalorder %s13, 2
    %p31 = por %p29, %p30
    %p32 = scmp.ne.s32.totalorder %s21, %s22
    %p33 = scmp.eq.s32.totalorder %s13, 0
    %p34 = por %p32, %p33
    %p35 = scmp.ne.s32.totalorder %s21, %s22
    %p36 = scmp.eq.s32.totalorder %s14, 2
    %p37 = por %p35, %p36
    %p39 = scmp.ne.s32.totalorder %s22, %s38
    %p40 = scmp.eq.s32.totalorder %s14, 0
    %p41 = por %p39, %p40
    %s42 = ssub.s32 %s8, %s15
    %p43 = scmp.eq.s32.totalorder %s42, 0
    %s45 = sadd.s32 %s44, 1
    %s46 = scalar_select %p43, %s44, %s45
    %p49 = pneg %p43
    %p50 = scmp.eq.s32.totalorder %s8, 2
    %p51 = por %p49, %p50
    %p52 = scmp.ne.s32.totalorder %s44, %s47
    %p53 = scmp.eq.s32.totalorder %s8, 0
    %p54 = por %p52, %p53
    %p55 = scmp.ne.s32.totalorder %s44, %s47
    %p56 = scmp.eq.s32.totalorder %s13, 2
    %p57 = por %p55, %p56
    %p58 = scmp.ne.s32.totalorder %s47, %s48
    %p59 = scmp.eq.s32.totalorder %s13, 0
    %p60 = por %p58, %p59
    %p61 = scmp.ne.s32.totalorder %s47, %s48
    %p62 = scmp.eq.s32.totalorder %s14, 2
    %p63 = por %p61, %p62
    %p65 = scmp.ne.s32.totalorder %s48, %s64
    %p66 = scmp.eq.s32.totalorder %s14, 0
    %p67 = por %p65, %p66
    %s68 = ssub.s32 %s8, %s15
    %p69 = scmp.eq.s32.totalorder %s68, 0
    %s71 = sadd.s32 %s70, 1
    %s72 = scalar_select %p69, %s70, %s71
    %p75 = pneg %p69
    %p76 = scmp.eq.s32.totalorder %s8, 2
    %p77 = por %p75, %p76
    %p78 = scmp.ne.s32.totalorder %s70, %s73
    %p79 = scmp.eq.s32.totalorder %s8, 0
    %p80 = por %p78, %p79
    %p81 = scmp.ne.s32.totalorder %s70, %s73
    %p82 = scmp.eq.s32.totalorder %s13, 2
    %p83 = por %p81, %p82
    %p84 = scmp.ne.s32.totalorder %s73, %s74
    %p85 = scmp.eq.s32.totalorder %s13, 0
    %p86 = por %p84, %p85
    %p87 = scmp.ne.s32.totalorder %s73, %s74
    %p88 = scmp.eq.s32.totalorder %s14, 2
    %p89 = por %p87, %p88
    %p91 = scmp.ne.s32.totalorder %s74, %s90
    %p92 = scmp.eq.s32.totalorder %s14, 0
    %p93 = por %p91, %p92
    %p94 = scmp.le.s32.totalorder 1, %s8
    %p95 = scmp.lt.s32.totalorder %s8, 4
    %p96 = pnand %p94, %p95
    %p97 = pneg %p96
    // Predicated region
    $region9: #{s2cnn_equators_forward.10} parent=5 // pred_check
      _
    $region10: #{s2cnn_equators_forward.10} parent=5 // pred_check_branch
      %99 = sbr.rel (%p96) target = $region12
    $region11: #{s2cnn_equators_forward.10} parent=5 // pred_region
      %s100 = ssub.s32 %s8, 1
    $region12: #{s2cnn_equators_forward.10} parent=5 // pred_fallthru
      _
    %p101 = scmp.lt.s32.totalorder %s8, 3
    // Predicated region
    $region13: #{s2cnn_equators_forward.10} parent=5 // pred_check
      %p102 = pneg %p101
    $region14: #{s2cnn_equators_forward.10} parent=5 // pred_check_branch
      %104 = sbr.rel (%p102) target = $region16
    $region15: #{s2cnn_equators_forward.10} parent=5 // pred_region
      // Predicated region
      $region17: #{s2cnn_equators_forward.10} parent=15 // pred_check
        %p105 = pneg %p28
      $region18: #{s2cnn_equators_forward.10} parent=15 // pred_check_branch
        %107 = sbr.rel (%p105) target = $region20
      $region19: #{s2cnn_equators_forward.10} parent=15 // pred_region
        %p108 = scmp.lt.s32.totalorder %s8, 2
        %s109 = scalar_select %p108, %s8, 2
        %s110 = smul.addr %s109, 2
        %s111 = smul.addr %s110, 8
        %s112 = scalar_lea.vmem %s0, %s111
      $region20: #{s2cnn_equators_forward.10} parent=15 // pred_fallthru
        _
      // Predicated region
      $region21: #{s2cnn_equators_forward.10} parent=15 // pred_check
        %p113 = pneg %p54
      $region22: #{s2cnn_equators_forward.10} parent=15 // pred_check_branch
        %115 = sbr.rel (%p113) target = $region24
      $region23: #{s2cnn_equators_forward.10} parent=15 // pred_region
        %p116 = scmp.lt.s32.totalorder %s8, 2
        %s117 = scalar_select %p116, %s8, 2
        %s118 = smul.addr %s117, 8
        %s119 = scalar_lea.vmem %s1, %s118
      $region24: #{s2cnn_equators_forward.10} parent=15 // pred_fallthru
        _
    $region16: #{s2cnn_equators_forward.10} parent=5 // pred_fallthru
      _
    %p120 = scmp.le.s32.totalorder 1, %s8
    %p121 = scmp.lt.s32.totalorder %s8, 4
    %p122 = pnand %p120, %p121
    %p123 = pneg %p122
    // Predicated region
    $region25: #{s2cnn_equators_forward.10} parent=5 // pred_check
      _
    $region26: #{s2cnn_equators_forward.10} parent=5 // pred_check_branch
      %125 = sbr.rel (%p122) target = $region28
    $region27: #{s2cnn_equators_forward.10} parent=5 // pred_region
      %s126 = ssub.s32 %s8, 1
      %p127 = scmp.lt.s32.totalorder %s13, 2
      %s128 = scalar_select %p127, %s13, 2
      %s129 = smul.addr %s128, 2
      %s130 = smul.addr %s129, 8
      %s131 = scalar_lea.vmem %s0, %s130
      %p132 = pneg %p34
      %p133 = pneg %p31
      %p134 = scmp.lt.s32.totalorder %s13, 2
      %s135 = scalar_select %p134, %s13, 2
      %s136 = smul.addr %s135, 8
      %s137 = scalar_lea.vmem %s1, %s136
      %p138 = pneg %p60
      %p139 = pneg %p57
      %p140 = pneg %p86
      %p141 = pneg %p83
      %p142 = scmp.lt.s32.totalorder %s13, 2
      %s143 = scalar_select %p142, %s13, 2
      %s144 = smul.addr %s143, 2
      %s145 = smul.addr %s144, 8
      %s146 = scalar_lea.vmem %s2, %s145
      %p147 = scmp.lt.s32.totalorder %s13, 2
      %s148 = scalar_select %p147, %s13, 2
      %s149 = smul.addr %s148, 2
      %s150 = smul.addr %s149, 8
      %s151 = scalar_lea.vmem %s0, %s150
      %p152 = scmp.lt.s32.totalorder %s13, 2
      %s153 = scalar_select %p152, %s13, 2
      %s154 = smul.addr %s153, 8
      %s155 = scalar_lea.vmem %s1, %s154
      %p156 = scmp.lt.s32.totalorder %s13, 2
      %s157 = scalar_select %p156, %s13, 2
      %s158 = smul.addr %s157, 2
      %s159 = smul.addr %s158, 8
      %s160 = scalar_lea.vmem %s2, %s159
      %v161 = vld [vmem:[%s151] sm:$0xff]
      %v162 = vld [vmem:[%s151 + $0x8] sm:$0x3]
      %v163 = vld [vmem:[%s155] sm:$0x3f]
      %vm164 = vcmask 48128
      %v166 = vsel %vm164, %v161, 0
      %v169 = vsel %vm164, %v162, 0
      %vm171 = vcmask 1045504
      %v173 = vsel %vm171, %v163, 0
      %175 = vmatprep.subr.mxu0 0.0
      %176 = vmatpush1.msra.mxu0 0.0
      %177 = vmatprep.subr.mxu0 0.0
      %178 = vmatpush1.msra.mxu0 0.0
      %179 = vmatprep.subr.mxu0 0.0
      %180 = vmatpush1.msra.mxu0 0.0
      %181 = vmatprep.subr.mxu0 0.0
      %182 = vmatpush1.msra.mxu0 0.0
      %183 = vmatprep.subr.mxu0 0.0
      %184 = vmatpush1.msra.mxu0 0.0
      %185 = vmatprep.subr.mxu0 0.0
      %186 = vmatpush1.msra.mxu0 0.0
      %187 = vmatprep.subr.mxu0 0.0
      %188 = vmatpush1.msra.mxu0 0.0
      %189 = vmatprep.subr.mxu0 0.0
      %190 = vmatpush1.msra.mxu0 0.0
      %191 = vmatprep.subr.mxu0 0.0
      %192 = vmatpush1.msra.mxu0 0.0
      %193 = vmatprep.subr.mxu0 0.0
      %194 = vmatpush1.msra.mxu0 0.0
      %195 = vmatprep.subr.mxu0 0.0
      %196 = vmatpush1.msra.mxu0 0.0
      %197 = vmatprep.subr.mxu0 0.0
      %198 = vmatpush1.msra.mxu0 0.0
      %199 = vmatprep.subr.mxu0 0.0
      %200 = vmatpush1.msra.mxu0 0.0
      %201 = vmatprep.subr.mxu0 0.0
      %202 = vmatpush1.msra.mxu0 0.0
      %203 = vmatprep.subr.mxu0 0.0
      %204 = vmatpush1.msra.mxu0 0.0
      %205 = vmatprep.subr.mxu0 0.0
      %206 = vmatpush1.msra.mxu0 %v173
      %207 = vmatprep.subr.mxu0 0.0
      %208 = vmatpush2.msra.mxu0 0.0
      %209 = vmatprep.subr.mxu0 0.0
      %210 = vmatpush2.msra.mxu0 0.0
      %211 = vmatprep.subr.mxu0 0.0
      %212 = vmatpush2.msra.mxu0 0.0
      %213 = vmatprep.subr.mxu0 0.0
      %214 = vmatpush2.msra.mxu0 0.0
      %215 = vmatprep.subr.mxu0 0.0
      %216 = vmatpush2.msra.mxu0 0.0
      %217 = vmatprep.subr.mxu0 0.0
      %218 = vmatpush2.msra.mxu0 0.0
      %219 = vmatprep.subr.mxu0 0.0
      %220 = vmatpush2.msra.mxu0 0.0
      %221 = vmatprep.subr.mxu0 0.0
      %222 = vmatpush2.msra.mxu0 0.0
      %223 = vmatprep.subr.mxu0 0.0
      %224 = vmatpush2.msra.mxu0 0.0
      %225 = vmatprep.subr.mxu0 0.0
      %226 = vmatpush2.msra.mxu0 0.0
      %227 = vmatprep.subr.mxu0 0.0
      %228 = vmatpush2.msra.mxu0 0.0
      %229 = vmatprep.subr.mxu0 0.0
      %230 = vmatpush2.msra.mxu0 0.0
      %231 = vmatprep.subr.mxu0 0.0
      %232 = vmatpush2.msra.mxu0 0.0
      %233 = vmatprep.subr.mxu0 0.0
      %234 = vmatpush2.msra.mxu0 0.0
      %235 = vmatprep.subr.mxu0 0.0
      %236 = vmatpush2.msra.mxu0 0.0
      %237 = vmatprep.subr.mxu0 0.0
      %238 = vmatpush2.msra.mxu0 0.0
      %239 = vmatprep.mubr.f32.mxu0 0.0
      %240 = vmatmul.mubr.f32.gmra.mxu0 %v166
      %v241 = vpop.f32.mrf.mxu0
      %v242 = vadd.f32 0.0, %v241
      %v243 = vpop.f32.mrf.mxu0
      %244 = vmatprep.mubr.f32.mxu0 0.0
      %245 = vmatmul.mubr.f32.gmra.mxu0 %v169
      %v246 = vpop.f32.mrf.mxu0
      %v247 = vadd.f32 0.0, %v246
      %v248 = vpop.f32.mrf.mxu0
      %249 = vdwg.mxu0
      %vm250 = vcmask 326656
      %251 = vst.msk [vmem:[%s160] sm:$0xff] %vm250, %v242
      %vm252 = vcmask 320512
      %253 = vst.msk [vmem:[%s160 + $0x8] sm:$0x3] %vm252, %v247
      %p254 = scmp.lt.s32.totalorder %s13, 2
      %s255 = scalar_select %p254, %s13, 2
      %s256 = smul.addr %s255, 2
      %s257 = smul.addr %s256, 8
      %s258 = scalar_lea.vmem %s2, %s257
      // Predicated region
      $region29: #{s2cnn_equators_forward.10} parent=27 // pred_check
        %p259 = pneg %p83
      $region30: #{s2cnn_equators_forward.10} parent=27 // pred_check_branch
        %261 = sbr.rel (%p259) target = $region32
      $region31: #{s2cnn_equators_forward.10} parent=27 // pred_region
        _
      $region32: #{s2cnn_equators_forward.10} parent=27 // pred_fallthru
        _
    $region28: #{s2cnn_equators_forward.10} parent=5 // pred_fallthru
      _
    %p262 = scmp.le.s32.totalorder 2, %s8
    // Predicated region
    $region33: #{s2cnn_equators_forward.10} parent=5 // pred_check
      %p263 = pneg %p262
    $region34: #{s2cnn_equators_forward.10} parent=5 // pred_check_branch
      %265 = sbr.rel (%p263) target = $region36
    $region35: #{s2cnn_equators_forward.10} parent=5 // pred_region
      %s266 = ssub.s32 %s8, 2
      // Predicated region
      $region37: #{s2cnn_equators_forward.10} parent=35 // pred_check
        %p267 = pneg %p89
      $region38: #{s2cnn_equators_forward.10} parent=35 // pred_check_branch
        %269 = sbr.rel (%p267) target = $region40
      $region39: #{s2cnn_equators_forward.10} parent=35 // pred_region
        %p270 = scmp.lt.s32.totalorder %s14, 2
        %s271 = scalar_select %p270, %s14, 2
        %s272 = smul.addr %s271, 2
        %s273 = smul.addr %s272, 8
        %s274 = scalar_lea.vmem %s2, %s273
      $region40: #{s2cnn_equators_forward.10} parent=35 // pred_fallthru
        _
    $region36: #{s2cnn_equators_forward.10} parent=5 // pred_fallthru
      _
  $region6: #{s2cnn_equators_forward.10} parent=0 // loop_footer
    %s12 = sadd.s32 1, %s8
  $region7: #{s2cnn_equators_forward.10} parent=0 // loop_footer_branch
    %7 = sbr.rel target = $region3
  $region8: #{s2cnn_equators_forward.10} parent=0 // loop_exit
    _

// kernel: s2cnn_equators_forward.11
$region0: #{s2cnn_equators_forward.11}
  #allocation0 [shape = 'u32[]', space=smem, size = 0x4, offset = 0x4, fixed_abs, tag = 'smem constant byte address 0x4 - core index']
  #allocation1 [shape = 'u32[144,128]{1,0:T(1,128)}', space=vmem, size = 0x12000, scoped, tag = 'internal scratch']
  #allocation2 [shape = 'f32[8,216]{1,0:T(8,128)}', space=vmem, size = 0x2000, scoped, tag = 'scratch operand']
  %s0 = inlined_call_operand.vmem [shape: f32[8,70], index: 0, kind: input, shape index: {}]
  %s1 = inlined_call_operand.vmem [shape: f32[70,216], index: 1, kind: input, shape index: {}]
  %s2 = inlined_call_operand.vmem [shape: f32[8,1], index: 2, kind: input, shape index: {}]
  %s3 = inlined_call_operand.vmem [shape: f32[8,216], index: 3, kind: output, shape index: {}]
  %s4 = sld [smem:[#allocation0]]
  $region30: #{s2cnn_equators_forward.11} parent=0
    _
  %s6 = ssub.s32 1, %s4
  %s7 = scalar_select 0, %s6, %s4
  // Predicated region
  $region2: #{s2cnn_equators_forward.11} parent=0 // pred_check
    _
  $region3: #{s2cnn_equators_forward.11} parent=0 // pred_check_branch
    %9 = sbr.rel (0) target = $region5
  $region4: #{s2cnn_equators_forward.11} parent=0 // pred_region
    _
  $region5: #{s2cnn_equators_forward.11} parent=0 // pred_fallthru
    _
  // Predicated region
  $region6: #{s2cnn_equators_forward.11} parent=0 // pred_check
    _
  $region7: #{s2cnn_equators_forward.11} parent=0 // pred_check_branch
    %11 = sbr.rel (0) target = $region9
  $region8: #{s2cnn_equators_forward.11} parent=0 // pred_region
    _
  $region9: #{s2cnn_equators_forward.11} parent=0 // pred_fallthru
    _
  // Predicated region
  $region10: #{s2cnn_equators_forward.11} parent=0 // pred_check
    _
  $region11: #{s2cnn_equators_forward.11} parent=0 // pred_check_branch
    %13 = sbr.rel (0) target = $region13
  $region12: #{s2cnn_equators_forward.11} parent=0 // pred_region
    _
  $region13: #{s2cnn_equators_forward.11} parent=0 // pred_fallthru
    _
  %p14 = scmp.eq.s32.totalorder 0, 0
  // Predicated region
  $region14: #{s2cnn_equators_forward.11} parent=0 // pred_check
    %p15 = pneg %p14
  $region15: #{s2cnn_equators_forward.11} parent=0 // pred_check_branch
    %17 = sbr.rel (%p15) target = $region17
  $region16: #{s2cnn_equators_forward.11} parent=0 // pred_region
    %18 = vst [vmem:[#allocation2] sm:$0xff] 0.0
    %vm19 = vcmask 719872
    %20 = vst.msk [vmem:[#allocation2 + $0x8] sm:$0xff] %vm19, 0.0
  $region17: #{s2cnn_equators_forward.11} parent=0 // pred_fallthru
    _
  %v21 = vld [vmem:[%s0] sm:$0xff]
  %v22 = vld [vmem:[#allocation2] sm:$0xff]
  %v23 = vld [vmem:[#allocation2 + $0x8] sm:$0xff]
  %v24 = vld [vmem:[%s1] sm:$0xff]
  %v25 = vld [vmem:[%s1 + $0x8] sm:$0xff]
  %v26 = vld [vmem:[%s1 + $0x10] sm:$0xff]
  %v27 = vld [vmem:[%s1 + $0x18] sm:$0xff]
  %v28 = vld [vmem:[%s1 + $0x20] sm:$0xff]
  %v29 = vld [vmem:[%s1 + $0x28] sm:$0xff]
  %v30 = vld [vmem:[%s1 + $0x30] sm:$0xff]
  %v31 = vld [vmem:[%s1 + $0x38] sm:$0xff]
  %v32 = vld [vmem:[%s1 + $0x40] sm:$0xff]
  %v33 = vld [vmem:[%s1 + $0x48] sm:$0xff]
  %v34 = vld [vmem:[%s1 + $0x50] sm:$0xff]
  %v35 = vld [vmem:[%s1 + $0x58] sm:$0xff]
  %v36 = vld [vmem:[%s1 + $0x60] sm:$0xff]
  %v37 = vld [vmem:[%s1 + $0x68] sm:$0xff]
  %v38 = vld [vmem:[%s1 + $0x70] sm:$0xff]
  %v39 = vld [vmem:[%s1 + $0x78] sm:$0xff]
  %v40 = vld [vmem:[%s1 + $0x80] sm:$0x3f]
  %v41 = vld [vmem:[%s1 + $0x88] sm:$0x3f]
  %vm42 = vcmask 572416
  %v44 = vsel %vm42, %v21, 0
  %vm46 = vcmask 1045504
  %v48 = vsel %vm46, %v40, 0
  %v51 = vsel %vm46, %v41, 0
  %53 = vmatprep.subr.mxu0 0.0
  %54 = vmatpush1.msra.mxu0 0.0
  %55 = vmatprep.subr.mxu0 0.0
  %56 = vmatpush1.msra.mxu0 0.0
  %57 = vmatprep.subr.mxu0 0.0
  %58 = vmatpush1.msra.mxu0 0.0
  %59 = vmatprep.subr.mxu0 0.0
  %60 = vmatpush1.msra.mxu0 0.0
  %61 = vmatprep.subr.mxu0 0.0
  %62 = vmatpush1.msra.mxu0 0.0
  %63 = vmatprep.subr.mxu0 0.0
  %64 = vmatpush1.msra.mxu0 0.0
  %65 = vmatprep.subr.mxu0 0.0
  %66 = vmatpush1.msra.mxu0 0.0
  %67 = vmatprep.subr.mxu0 %v51
  %68 = vmatpush1.msra.mxu0 %v48
  %69 = vmatprep.subr.mxu0 %v39
  %70 = vmatpush1.msra.mxu0 %v38
  %71 = vmatprep.subr.mxu0 %v37
  %72 = vmatpush1.msra.mxu0 %v36
  %73 = vmatprep.subr.mxu0 %v35
  %74 = vmatpush1.msra.mxu0 %v34
  %75 = vmatprep.subr.mxu0 %v33
  %76 = vmatpush1.msra.mxu0 %v32
  %77 = vmatprep.subr.mxu0 %v31
  %78 = vmatpush1.msra.mxu0 %v30
  %79 = vmatprep.subr.mxu0 %v29
  %80 = vmatpush1.msra.mxu0 %v28
  %81 = vmatprep.subr.mxu0 %v27
  %82 = vmatpush1.msra.mxu0 %v26
  %83 = vmatprep.subr.mxu0 %v25
  %84 = vmatpush1.msra.mxu0 %v24
  %85 = vmatprep.subr.mxu0 0.0
  %86 = vmatpush2.msra.mxu0 0.0
  %87 = vmatprep.subr.mxu0 0.0
  %88 = vmatpush2.msra.mxu0 0.0
  %89 = vmatprep.subr.mxu0 0.0
  %90 = vmatpush2.msra.mxu0 0.0
  %91 = vmatprep.subr.mxu0 0.0
  %92 = vmatpush2.msra.mxu0 0.0
  %93 = vmatprep.subr.mxu0 0.0
  %94 = vmatpush2.msra.mxu0 0.0
  %95 = vmatprep.subr.mxu0 0.0
  %96 = vmatpush2.msra.mxu0 0.0
  %97 = vmatprep.subr.mxu0 0.0
  %98 = vmatpush2.msra.mxu0 0.0
  %99 = vmatprep.subr.mxu0 0.0
  %100 = vmatpush2.msra.mxu0 0.0
  %101 = vmatprep.subr.mxu0 0.0
  %102 = vmatpush2.msra.mxu0 0.0
  %103 = vmatprep.subr.mxu0 0.0
  %104 = vmatpush2.msra.mxu0 0.0
  %105 = vmatprep.subr.mxu0 0.0
  %106 = vmatpush2.msra.mxu0 0.0
  %107 = vmatprep.subr.mxu0 0.0
  %108 = vmatpush2.msra.mxu0 0.0
  %109 = vmatprep.subr.mxu0 0.0
  %110 = vmatpush2.msra.mxu0 0.0
  %111 = vmatprep.subr.mxu0 0.0
  %112 = vmatpush2.msra.mxu0 0.0
  %113 = vmatprep.subr.mxu0 0.0
  %114 = vmatpush2.msra.mxu0 0.0
  %115 = vmatprep.subr.mxu0 0.0
  %116 = vmatpush2.msra.mxu0 0.0
  %117 = vmatprep.mubr.f32.mxu0 0.0
  %118 = vmatmul.mubr.f32.gmra.mxu0 %v44
  %v119 = vpop.f32.mrf.mxu0
  %v120 = vadd.f32 0.0, %v119
  %v121 = vpop.f32.mrf.mxu0
  %v122 = vadd.f32 0.0, %v121
  %123 = vdwg.mxu0
  %v124 = vadd.f32 %v22, %v120
  %v125 = vadd.f32 %v23, %v122
  %126 = vst [vmem:[#allocation2] sm:$0xff] %v124
  %vm127 = vcmask 719872
  %128 = vst.msk [vmem:[#allocation2 + $0x8] sm:$0xff] %vm127, %v125
  // Predicated region
  $region18: #{s2cnn_equators_forward.11} parent=0 // pred_check
    %p129 = pneg %p14
  $region19: #{s2cnn_equators_forward.11} parent=0 // pred_check_branch
    %131 = sbr.rel (%p129) target = $region21
  $region20: #{s2cnn_equators_forward.11} parent=0 // pred_region
    %v132 = vld [vmem:[#allocation2] sm:$0xff]
    %v133 = vld [vmem:[#allocation2 + $0x8] sm:$0xff]
    %v134 = vld [vmem:[%s2] sm:$0xff]
    %136 = vset.pattern.permute.xlu0 0
    %137 = vperm.xlu0 %136, %v134
    %v138 = vpop.permute.xlu0 %137
    %v140 = vadd.f32 %v132, %v138
    %v141 = vadd.f32 %v133, %v138
    %142 = vst [vmem:[%s3] sm:$0xff] %v140
    %143 = vst.msk [vmem:[%s3 + $0x8] sm:$0xff] %vm127, %v141
  $region21: #{s2cnn_equators_forward.11} parent=0 // pred_fallthru
    _
  // Predicated region
  $region22: #{s2cnn_equators_forward.11} parent=0 // pred_check
    _
  $region23: #{s2cnn_equators_forward.11} parent=0 // pred_check_branch
    %145 = sbr.rel (0) target = $region25
  $region24: #{s2cnn_equators_forward.11} parent=0 // pred_region
    _
  $region25: #{s2cnn_equators_forward.11} parent=0 // pred_fallthru
    _
  // Predicated region
  $region26: #{s2cnn_equators_forward.11} parent=0 // pred_check
    _
  $region27: #{s2cnn_equators_forward.11} parent=0 // pred_check_branch
    %147 = sbr.rel (0) target = $region29
  $region28: #{s2cnn_equators_forward.11} parent=0 // pred_region
    _
  $region29: #{s2cnn_equators_forward.11} parent=0 // pred_fallthru
    _

// kernel: neg.3
$region0: #{neg.3}
  #allocation0 [shape = 's32[1]{0}', space=sflag, size = 0x4, scoped, tag = 'scoped memory for neg.3']
  %s0 = inlined_call_operand.vmem [shape: f32[400], index: 0, kind: input, shape index: {}]
  %s1 = inlined_call_operand.vmem [shape: f32[400], index: 1, kind: output, shape index: {}]
  %v2 = vld [vmem:[%s0] sm:$0xf]
  %3 = xla_tuple %v2
  %4 = xla_tuple %3
  %v5 = vxor.u32 %v2, 2147483648
  %6 = xla_tuple %v5
  %7 = vst [vmem:[%s1] sm:$0xf] %v5

// kernel: s2cnn_equators_forward.12
$region0: #{s2cnn_equators_forward.12}
  #allocation0 [shape = 'u32[]', space=smem, size = 0x4, offset = 0x4, fixed_abs, tag = 'smem constant byte address 0x4 - core index']
  #allocation1 [shape = 'u32[144,128]{1,0:T(1,128)}', space=vmem, size = 0x12000, scoped, tag = 'internal scratch']
  #allocation2 [shape = 'f32[8,20]{1,0:T(8,128)}', space=vmem, size = 0x1000, scoped, tag = 'scratch operand']
  %s0 = inlined_call_operand.vmem [shape: f32[8,216], index: 0, kind: input, shape index: {}]
  %s1 = inlined_call_operand.vmem [shape: f32[216,20], index: 1, kind: input, shape index: {}]
  %s2 = inlined_call_operand.vmem [shape: f32[8,20], index: 2, kind: output, shape index: {}]
  %s3 = sld [smem:[#allocation0]]
  $region26: #{s2cnn_equators_forward.12} parent=0
    _
  %s5 = ssub.s32 1, %s3
  %s6 = scalar_select 0, %s5, %s3
  // Predicated region
  $region2: #{s2cnn_equators_forward.12} parent=0 // pred_check
    _
  $region3: #{s2cnn_equators_forward.12} parent=0 // pred_check_branch
    %8 = sbr.rel (0) target = $region5
  $region4: #{s2cnn_equators_forward.12} parent=0 // pred_region
    _
  $region5: #{s2cnn_equators_forward.12} parent=0 // pred_fallthru
    _
  // Predicated region
  $region6: #{s2cnn_equators_forward.12} parent=0 // pred_check
    _
  $region7: #{s2cnn_equators_forward.12} parent=0 // pred_check_branch
    %10 = sbr.rel (0) target = $region9
  $region8: #{s2cnn_equators_forward.12} parent=0 // pred_region
    _
  $region9: #{s2cnn_equators_forward.12} parent=0 // pred_fallthru
    _
  %p11 = scmp.eq.s32.totalorder 0, 0
  // Predicated region
  $region10: #{s2cnn_equators_forward.12} parent=0 // pred_check
    %p12 = pneg %p11
  $region11: #{s2cnn_equators_forward.12} parent=0 // pred_check_branch
    %14 = sbr.rel (%p12) target = $region13
  $region12: #{s2cnn_equators_forward.12} parent=0 // pred_region
    %vm15 = vcmask 162816
    %16 = vst.msk [vmem:[#allocation2] sm:$0xff] %vm15, 0.0
  $region13: #{s2cnn_equators_forward.12} parent=0 // pred_fallthru
    _
  %v17 = vld [vmem:[%s0] sm:$0xff]
  %v18 = vld [vmem:[%s0 + $0x8] sm:$0xff]
  %vm19 = vcmp.gt.f32.partialorder %v17, 20.0
  %vm20 = vcmp.gt.f32.partialorder %v18, 20.0
  %v21 = vmin.f32 %v17, 20.0
  %v22 = vmin.f32 %v18, 20.0
  %v23 = vmul.f32 %v21, 1.442695
  %v24 = vpow.pop %v23
  %v25 = vmul.f32 %v22, 1.442695
  %v26 = vpow.pop %v25
  %v27 = vadd.f32 %v24, 1.0
  %v28 = vlog2.pop %v27
  %v29 = vmul.f32 %v28, 0.6931472
  %v30 = vmul.f32 -0.5, %v24
  %v31 = vadd.f32 %v30, 1.0
  %v32 = vmul.f32 %v31, %v24
  %v33 = vand.u32 2147483647, %v24
  %vm34 = vcmp.lt.f32.partialorder %v33, 0.0004427343
  %v35 = vsel %vm34, %v32, %v29
  %v36 = vadd.f32 %v26, 1.0
  %v37 = vlog2.pop %v36
  %v38 = vmul.f32 %v37, 0.6931472
  %v39 = vmul.f32 -0.5, %v26
  %v40 = vadd.f32 %v39, 1.0
  %v41 = vmul.f32 %v40, %v26
  %v42 = vand.u32 2147483647, %v26
  %vm43 = vcmp.lt.f32.partialorder %v42, 0.0004427343
  %v44 = vsel %vm43, %v41, %v38
  %v45 = vsel %vm19, %v17, %v35
  %v46 = vsel %vm20, %v18, %v44
  %v47 = vld [vmem:[#allocation2] sm:$0xff]
  %v48 = vld [vmem:[%s1] sm:$0xff]
  %v49 = vld [vmem:[%s1 + $0x8] sm:$0xff]
  %v50 = vld [vmem:[%s1 + $0x10] sm:$0xff]
  %v51 = vld [vmem:[%s1 + $0x18] sm:$0xff]
  %v52 = vld [vmem:[%s1 + $0x20] sm:$0xff]
  %v53 = vld [vmem:[%s1 + $0x28] sm:$0xff]
  %v54 = vld [vmem:[%s1 + $0x30] sm:$0xff]
  %v55 = vld [vmem:[%s1 + $0x38] sm:$0xff]
  %v56 = vld [vmem:[%s1 + $0x40] sm:$0xff]
  %v57 = vld [vmem:[%s1 + $0x48] sm:$0xff]
  %v58 = vld [vmem:[%s1 + $0x50] sm:$0xff]
  %v59 = vld [vmem:[%s1 + $0x58] sm:$0xff]
  %v60 = vld [vmem:[%s1 + $0x60] sm:$0xff]
  %v61 = vld [vmem:[%s1 + $0x68] sm:$0xff]
  %v62 = vld [vmem:[%s1 + $0x70] sm:$0xff]
  %v63 = vld [vmem:[%s1 + $0x78] sm:$0xff]
  %v64 = vld [vmem:[%s1 + $0x80] sm:$0xff]
  %v65 = vld [vmem:[%s1 + $0x88] sm:$0xff]
  %v66 = vld [vmem:[%s1 + $0x90] sm:$0xff]
  %v67 = vld [vmem:[%s1 + $0x98] sm:$0xff]
  %v68 = vld [vmem:[%s1 + $0xa0] sm:$0xff]
  %v69 = vld [vmem:[%s1 + $0xa8] sm:$0xff]
  %v70 = vld [vmem:[%s1 + $0xb0] sm:$0xff]
  %v71 = vld [vmem:[%s1 + $0xb8] sm:$0xff]
  %v72 = vld [vmem:[%s1 + $0xc0] sm:$0xff]
  %v73 = vld [vmem:[%s1 + $0xc8] sm:$0xff]
  %v74 = vld [vmem:[%s1 + $0xd0] sm:$0xff]
  %vm75 = vcmask 719872
  %v77 = vsel %vm75, %v46, 0
  %79 = vmatprep.subr.mxu0 0.0
  %80 = vmatpush1.msra.mxu0 %v63
  %81 = vmatprep.subr.mxu0 0.0
  %82 = vmatpush1.msra.mxu0 %v62
  %83 = vmatprep.subr.mxu0 0.0
  %84 = vmatpush1.msra.mxu0 %v61
  %85 = vmatprep.subr.mxu0 0.0
  %86 = vmatpush1.msra.mxu0 %v60
  %87 = vmatprep.subr.mxu0 0.0
  %88 = vmatpush1.msra.mxu0 %v59
  %89 = vmatprep.subr.mxu0 0.0
  %90 = vmatpush1.msra.mxu0 %v58
  %91 = vmatprep.subr.mxu0 0.0
  %92 = vmatpush1.msra.mxu0 %v57
  %93 = vmatprep.subr.mxu0 0.0
  %94 = vmatpush1.msra.mxu0 %v56
  %95 = vmatprep.subr.mxu0 0.0
  %96 = vmatpush1.msra.mxu0 %v55
  %97 = vmatprep.subr.mxu0 0.0
  %98 = vmatpush1.msra.mxu0 %v54
  %99 = vmatprep.subr.mxu0 0.0
  %100 = vmatpush1.msra.mxu0 %v53
  %101 = vmatprep.subr.mxu0 0.0
  %102 = vmatpush1.msra.mxu0 %v52
  %103 = vmatprep.subr.mxu0 0.0
  %104 = vmatpush1.msra.mxu0 %v51
  %105 = vmatprep.subr.mxu0 0.0
  %106 = vmatpush1.msra.mxu0 %v50
  %107 = vmatprep.subr.mxu0 0.0
  %108 = vmatpush1.msra.mxu0 %v49
  %109 = vmatprep.subr.mxu0 0.0
  %110 = vmatpush1.msra.mxu0 %v48
  %111 = vmatprep.subr.mxu0 0.0
  %112 = vmatpush2.msra.mxu0 0.0
  %113 = vmatprep.subr.mxu0 0.0
  %114 = vmatpush2.msra.mxu0 0.0
  %115 = vmatprep.subr.mxu0 0.0
  %116 = vmatpush2.msra.mxu0 0.0
  %117 = vmatprep.subr.mxu0 0.0
  %118 = vmatpush2.msra.mxu0 0.0
  %119 = vmatprep.subr.mxu0 0.0
  %120 = vmatpush2.msra.mxu0 0.0
  %121 = vmatprep.subr.mxu0 0.0
  %122 = vmatpush2.msra.mxu0 %v74
  %123 = vmatprep.subr.mxu0 0.0
  %124 = vmatpush2.msra.mxu0 %v73
  %125 = vmatprep.subr.mxu0 0.0
  %126 = vmatpush2.msra.mxu0 %v72
  %127 = vmatprep.subr.mxu0 0.0
  %128 = vmatpush2.msra.mxu0 %v71
  %129 = vmatprep.subr.mxu0 0.0
  %130 = vmatpush2.msra.mxu0 %v70
  %131 = vmatprep.subr.mxu0 0.0
  %132 = vmatpush2.msra.mxu0 %v69
  %133 = vmatprep.subr.mxu0 0.0
  %134 = vmatpush2.msra.mxu0 %v68
  %135 = vmatprep.subr.mxu0 0.0
  %136 = vmatpush2.msra.mxu0 %v67
  %137 = vmatprep.subr.mxu0 0.0
  %138 = vmatpush2.msra.mxu0 %v66
  %139 = vmatprep.subr.mxu0 0.0
  %140 = vmatpush2.msra.mxu0 %v65
  %141 = vmatprep.subr.mxu0 0.0
  %142 = vmatpush2.msra.mxu0 %v64
  %143 = vmatprep.mubr.f32.mxu0 %v77
  %144 = vmatmul.mubr.f32.gmra.mxu0 %v45
  %v145 = vpop.f32.mrf.mxu0
  %v146 = vadd.f32 0.0, %v145
  %v147 = vpop.f32.mrf.mxu0
  %148 = vdwg.mxu0
  %v149 = vadd.f32 %v47, %v146
  %vm150 = vcmask 162816
  %151 = vst.msk [vmem:[#allocation2] sm:$0xff] %vm150, %v149
  // Predicated region
  $region14: #{s2cnn_equators_forward.12} parent=0 // pred_check
    %p152 = pneg %p11
  $region15: #{s2cnn_equators_forward.12} parent=0 // pred_check_branch
    %154 = sbr.rel (%p152) target = $region17
  $region16: #{s2cnn_equators_forward.12} parent=0 // pred_region
    %v155 = vld [vmem:[#allocation2] sm:$0xff]
    %156 = vst.msk [vmem:[%s2] sm:$0xff] %vm150, %v155
  $region17: #{s2cnn_equators_forward.12} parent=0 // pred_fallthru
    _
  // Predicated region
  $region18: #{s2cnn_equators_forward.12} parent=0 // pred_check
    _
  $region19: #{s2cnn_equators_forward.12} parent=0 // pred_check_branch
    %158 = sbr.rel (0) target = $region21
  $region20: #{s2cnn_equators_forward.12} parent=0 // pred_region
    _
  $region21: #{s2cnn_equators_forward.12} parent=0 // pred_fallthru
    _
  // Predicated region
  $region22: #{s2cnn_equators_forward.12} parent=0 // pred_check
    _
  $region23: #{s2cnn_equators_forward.12} parent=0 // pred_check_branch
    %160 = sbr.rel (0) target = $region25
  $region24: #{s2cnn_equators_forward.12} parent=0 // pred_region
    _
  $region25: #{s2cnn_equators_forward.12} parent=0 // pred_fallthru
    _

// kernel: s2cnn_equators_forward.13
$region0: #{s2cnn_equators_forward.13}
  #allocation0 [shape = 'u32[]', space=smem, size = 0x4, offset = 0x4, fixed_abs, tag = 'smem constant byte address 0x4 - core index']
  #allocation1 [shape = 'u32[144,128]{1,0:T(1,128)}', space=vmem, size = 0x12000, scoped, tag = 'internal scratch']
  #allocation2 [shape = 'f32[20,20]{1,0:T(8,128)}', space=vmem, size = 0x3000, scoped, tag = 'scratch operand']
  %s0 = inlined_call_operand.vmem [shape: f32[20,6], index: 0, kind: input, shape index: {}]
  %s1 = inlined_call_operand.vmem [shape: f32[6,20], index: 1, kind: input, shape index: {}]
  %s2 = inlined_call_operand.vmem [shape: f32[20,20], index: 2, kind: output, shape index: {}]
  %s3 = sld [smem:[#allocation0]]
  $region26: #{s2cnn_equators_forward.13} parent=0
    _
  %s5 = ssub.s32 1, %s3
  %s6 = scalar_select 0, %s5, %s3
  // Predicated region
  $region2: #{s2cnn_equators_forward.13} parent=0 // pred_check
    _
  $region3: #{s2cnn_equators_forward.13} parent=0 // pred_check_branch
    %8 = sbr.rel (0) target = $region5
  $region4: #{s2cnn_equators_forward.13} parent=0 // pred_region
    _
  $region5: #{s2cnn_equators_forward.13} parent=0 // pred_fallthru
    _
  // Predicated region
  $region6: #{s2cnn_equators_forward.13} parent=0 // pred_check
    _
  $region7: #{s2cnn_equators_forward.13} parent=0 // pred_check_branch
    %10 = sbr.rel (0) target = $region9
  $region8: #{s2cnn_equators_forward.13} parent=0 // pred_region
    _
  $region9: #{s2cnn_equators_forward.13} parent=0 // pred_fallthru
    _
  %p11 = scmp.eq.s32.totalorder 0, 0
  // Predicated region
  $region10: #{s2cnn_equators_forward.13} parent=0 // pred_check
    %p12 = pneg %p11
  $region11: #{s2cnn_equators_forward.13} parent=0 // pred_check_branch
    %14 = sbr.rel (%p12) target = $region13
  $region12: #{s2cnn_equators_forward.13} parent=0 // pred_region
    %vm15 = vcmask 162816
    %16 = vst.msk [vmem:[#allocation2] sm:$0xff] %vm15, 0.0
    %17 = vst.msk [vmem:[#allocation2 + $0x8] sm:$0xff] %vm15, 0.0
    %vm18 = vcmask 158720
    %19 = vst.msk [vmem:[#allocation2 + $0x10] sm:$0xf] %vm18, 0.0
  $region13: #{s2cnn_equators_forward.13} parent=0 // pred_fallthru
    _
  %v20 = vld [vmem:[%s0] sm:$0xff]
  %v21 = vld [vmem:[%s0 + $0x8] sm:$0xff]
  %v22 = vld [vmem:[%s0 + $0x10] sm:$0xf]
  %v23 = vld [vmem:[#allocation2] sm:$0xff]
  %v24 = vld [vmem:[#allocation2 + $0x8] sm:$0xff]
  %v25 = vld [vmem:[#allocation2 + $0x10] sm:$0xf]
  %v26 = vld [vmem:[%s1] sm:$0x3f]
  %vm27 = vcmask 48128
  %v29 = vsel %vm27, %v20, 0
  %v32 = vsel %vm27, %v21, 0
  %v35 = vsel %vm27, %v22, 0
  %vm37 = vcmask 1045504
  %v39 = vsel %vm37, %v26, 0
  %41 = vmatprep.subr.mxu0 0.0
  %42 = vmatpush1.msra.mxu0 0.0
  %43 = vmatprep.subr.mxu0 0.0
  %44 = vmatpush1.msra.mxu0 0.0
  %45 = vmatprep.subr.mxu0 0.0
  %46 = vmatpush1.msra.mxu0 0.0
  %47 = vmatprep.subr.mxu0 0.0
  %48 = vmatpush1.msra.mxu0 0.0
  %49 = vmatprep.subr.mxu0 0.0
  %50 = vmatpush1.msra.mxu0 0.0
  %51 = vmatprep.subr.mxu0 0.0
  %52 = vmatpush1.msra.mxu0 0.0
  %53 = vmatprep.subr.mxu0 0.0
  %54 = vmatpush1.msra.mxu0 0.0
  %55 = vmatprep.subr.mxu0 0.0
  %56 = vmatpush1.msra.mxu0 0.0
  %57 = vmatprep.subr.mxu0 0.0
  %58 = vmatpush1.msra.mxu0 0.0
  %59 = vmatprep.subr.mxu0 0.0
  %60 = vmatpush1.msra.mxu0 0.0
  %61 = vmatprep.subr.mxu0 0.0
  %62 = vmatpush1.msra.mxu0 0.0
  %63 = vmatprep.subr.mxu0 0.0
  %64 = vmatpush1.msra.mxu0 0.0
  %65 = vmatprep.subr.mxu0 0.0
  %66 = vmatpush1.msra.mxu0 0.0
  %67 = vmatprep.subr.mxu0 0.0
  %68 = vmatpush1.msra.mxu0 0.0
  %69 = vmatprep.subr.mxu0 0.0
  %70 = vmatpush1.msra.mxu0 0.0
  %71 = vmatprep.subr.mxu0 0.0
  %72 = vmatpush1.msra.mxu0 %v39
  %73 = vmatprep.subr.mxu0 0.0
  %74 = vmatpush2.msra.mxu0 0.0
  %75 = vmatprep.subr.mxu0 0.0
  %76 = vmatpush2.msra.mxu0 0.0
  %77 = vmatprep.subr.mxu0 0.0
  %78 = vmatpush2.msra.mxu0 0.0
  %79 = vmatprep.subr.mxu0 0.0
  %80 = vmatpush2.msra.mxu0 0.0
  %81 = vmatprep.subr.mxu0 0.0
  %82 = vmatpush2.msra.mxu0 0.0
  %83 = vmatprep.subr.mxu0 0.0
  %84 = vmatpush2.msra.mxu0 0.0
  %85 = vmatprep.subr.mxu0 0.0
  %86 = vmatpush2.msra.mxu0 0.0
  %87 = vmatprep.subr.mxu0 0.0
  %88 = vmatpush2.msra.mxu0 0.0
  %89 = vmatprep.subr.mxu0 0.0
  %90 = vmatpush2.msra.mxu0 0.0
  %91 = vmatprep.subr.mxu0 0.0
  %92 = vmatpush2.msra.mxu0 0.0
  %93 = vmatprep.subr.mxu0 0.0
  %94 = vmatpush2.msra.mxu0 0.0
  %95 = vmatprep.subr.mxu0 0.0
  %96 = vmatpush2.msra.mxu0 0.0
  %97 = vmatprep.subr.mxu0 0.0
  %98 = vmatpush2.msra.mxu0 0.0
  %99 = vmatprep.subr.mxu0 0.0
  %100 = vmatpush2.msra.mxu0 0.0
  %101 = vmatprep.subr.mxu0 0.0
  %102 = vmatpush2.msra.mxu0 0.0
  %103 = vmatprep.subr.mxu0 0.0
  %104 = vmatpush2.msra.mxu0 0.0
  %105 = vmatprep.mubr.f32.mxu0 0.0
  %106 = vmatmul.mubr.f32.gmra.mxu0 %v29
  %v107 = vpop.f32.mrf.mxu0
  %v108 = vadd.f32 0.0, %v107
  %v109 = vpop.f32.mrf.mxu0
  %110 = vmatprep.mubr.f32.mxu0 0.0
  %111 = vmatmul.mubr.f32.gmra.mxu0 %v32
  %v112 = vpop.f32.mrf.mxu0
  %v113 = vadd.f32 0.0, %v112
  %v114 = vpop.f32.mrf.mxu0
  %115 = vmatprep.mubr.f32.mxu0 0.0
  %116 = vmatmul.mubr.f32.gmra.mxu0 %v35
  %v117 = vpop.f32.mrf.mxu0
  %v118 = vadd.f32 0.0, %v117
  %v119 = vpop.f32.mrf.mxu0
  %120 = vdwg.mxu0
  %v121 = vadd.f32 %v23, %v108
  %v122 = vadd.f32 %v24, %v113
  %v123 = vadd.f32 %v25, %v118
  %vm124 = vcmask 162816
  %125 = vst.msk [vmem:[#allocation2] sm:$0xff] %vm124, %v121
  %126 = vst.msk [vmem:[#allocation2 + $0x8] sm:$0xff] %vm124, %v122
  %vm127 = vcmask 158720
  %128 = vst.msk [vmem:[#allocation2 + $0x10] sm:$0xf] %vm127, %v123
  // Predicated region
  $region14: #{s2cnn_equators_forward.13} parent=0 // pred_check
    %p129 = pneg %p11
  $region15: #{s2cnn_equators_forward.13} parent=0 // pred_check_branch
    %131 = sbr.rel (%p129) target = $region17
  $region16: #{s2cnn_equators_forward.13} parent=0 // pred_region
    %v132 = vld [vmem:[#allocation2] sm:$0xff]
    %v133 = vld [vmem:[#allocation2 + $0x8] sm:$0xff]
    %v134 = vld [vmem:[#allocation2 + $0x10] sm:$0xf]
    %135 = vst.msk [vmem:[%s2] sm:$0xff] %vm124, %v132
    %136 = vst.msk [vmem:[%s2 + $0x8] sm:$0xff] %vm124, %v133
    %137 = vst.msk [vmem:[%s2 + $0x10] sm:$0xf] %vm127, %v134
  $region17: #{s2cnn_equators_forward.13} parent=0 // pred_fallthru
    _
  // Predicated region
  $region18: #{s2cnn_equators_forward.13} parent=0 // pred_check
    _
  $region19: #{s2cnn_equators_forward.13} parent=0 // pred_check_branch
    %139 = sbr.rel (0) target = $region21
  $region20: #{s2cnn_equators_forward.13} parent=0 // pred_region
    _
  $region21: #{s2cnn_equators_forward.13} parent=0 // pred_fallthru
    _
  // Predicated region
  $region22: #{s2cnn_equators_forward.13} parent=0 // pred_check
    _
  $region23: #{s2cnn_equators_forward.13} parent=0 // pred_check_branch
    %141 = sbr.rel (0) target = $region25
  $region24: #{s2cnn_equators_forward.13} parent=0 // pred_region
    _
  $region25: #{s2cnn_equators_forward.13} parent=0 // pred_fallthru
    _

// kernel: s2cnn_equators_forward.14
$region0: #{s2cnn_equators_forward.14}
  #allocation0 [shape = 'u32[]', space=smem, size = 0x4, offset = 0x4, fixed_abs, tag = 'smem constant byte address 0x4 - core index']
  #allocation1 [shape = 'u32[144,128]{1,0:T(1,128)}', space=vmem, size = 0x12000, scoped, tag = 'internal scratch']
  %s0 = inlined_call_operand.vmem [shape: f32[2,6,24], index: 0, kind: input, shape index: {}]
  %s1 = inlined_call_operand.vmem [shape: f32[2,24,30], index: 1, kind: input, shape index: {}]
  %s2 = inlined_call_operand.vmem [shape: f32[2,6,30], index: 2, kind: output, shape index: {}]
  %s3 = sld [smem:[#allocation0]]
  $region41: #{s2cnn_equators_forward.14} parent=0
    _
  %s5 = ssub.s32 1, %s3
  %s6 = scalar_select 0, %s5, %s3
  loop: start=0, step=1, limit=4
  $region2: #{s2cnn_equators_forward.14} parent=0 // loop_pre_header
    _
  $region3: #{s2cnn_equators_forward.14} parent=0 // loop_header
    %s8 = sphi 0, %s12
    %p9 = scmp.ge.s32.totalorder %s8, 4
    %s18 = sphi 0, %s20
    %s21 = sphi 0, %s18
    %s22 = sphi 0, %s21
    %s38 = sphi 0, %s22
    %s44 = sphi 0, %s46
    %s47 = sphi 0, %s44
    %s48 = sphi 0, %s47
    %s64 = sphi 0, %s48
    %s70 = sphi 0, %s72
    %s73 = sphi 0, %s70
    %s74 = sphi 0, %s73
    %s90 = sphi 0, %s74
  $region4: #{s2cnn_equators_forward.14} parent=0 // loop_header_branch
    %11 = sbr.rel (%p9) target = $region8
  $region5: #{s2cnn_equators_forward.14} parent=0 // loop_body
    %s13 = ssub.s32 %s8, 1
    %s14 = ssub.s32 %s8, 2
    %s15 = sadd.s32 %s8, 1
    %s16 = ssub.s32 %s8, %s15
    %p17 = scmp.eq.s32.totalorder %s16, 0
    %s19 = sadd.s32 %s18, 1
    %s20 = scalar_select %p17, %s18, %s19
    %p23 = pneg %p17
    %p24 = scmp.eq.s32.totalorder %s8, 1
    %p25 = por %p23, %p24
    %p26 = scmp.ne.s32.totalorder %s18, %s21
    %p27 = scmp.eq.s32.totalorder %s8, 0
    %p28 = por %p26, %p27
    %p29 = scmp.ne.s32.totalorder %s18, %s21
    %p30 = scmp.eq.s32.totalorder %s13, 1
    %p31 = por %p29, %p30
    %p32 = scmp.ne.s32.totalorder %s21, %s22
    %p33 = scmp.eq.s32.totalorder %s13, 0
    %p34 = por %p32, %p33
    %p35 = scmp.ne.s32.totalorder %s21, %s22
    %p36 = scmp.eq.s32.totalorder %s14, 1
    %p37 = por %p35, %p36
    %p39 = scmp.ne.s32.totalorder %s22, %s38
    %p40 = scmp.eq.s32.totalorder %s14, 0
    %p41 = por %p39, %p40
    %s42 = ssub.s32 %s8, %s15
    %p43 = scmp.eq.s32.totalorder %s42, 0
    %s45 = sadd.s32 %s44, 1
    %s46 = scalar_select %p43, %s44, %s45
    %p49 = pneg %p43
    %p50 = scmp.eq.s32.totalorder %s8, 1
    %p51 = por %p49, %p50
    %p52 = scmp.ne.s32.totalorder %s44, %s47
    %p53 = scmp.eq.s32.totalorder %s8, 0
    %p54 = por %p52, %p53
    %p55 = scmp.ne.s32.totalorder %s44, %s47
    %p56 = scmp.eq.s32.totalorder %s13, 1
    %p57 = por %p55, %p56
    %p58 = scmp.ne.s32.totalorder %s47, %s48
    %p59 = scmp.eq.s32.totalorder %s13, 0
    %p60 = por %p58, %p59
    %p61 = scmp.ne.s32.totalorder %s47, %s48
    %p62 = scmp.eq.s32.totalorder %s14, 1
    %p63 = por %p61, %p62
    %p65 = scmp.ne.s32.totalorder %s48, %s64
    %p66 = scmp.eq.s32.totalorder %s14, 0
    %p67 = por %p65, %p66
    %s68 = ssub.s32 %s8, %s15
    %p69 = scmp.eq.s32.totalorder %s68, 0
    %s71 = sadd.s32 %s70, 1
    %s72 = scalar_select %p69, %s70, %s71
    %p75 = pneg %p69
    %p76 = scmp.eq.s32.totalorder %s8, 1
    %p77 = por %p75, %p76
    %p78 = scmp.ne.s32.totalorder %s70, %s73
    %p79 = scmp.eq.s32.totalorder %s8, 0
    %p80 = por %p78, %p79
    %p81 = scmp.ne.s32.totalorder %s70, %s73
    %p82 = scmp.eq.s32.totalorder %s13, 1
    %p83 = por %p81, %p82
    %p84 = scmp.ne.s32.totalorder %s73, %s74
    %p85 = scmp.eq.s32.totalorder %s13, 0
    %p86 = por %p84, %p85
    %p87 = scmp.ne.s32.totalorder %s73, %s74
    %p88 = scmp.eq.s32.totalorder %s14, 1
    %p89 = por %p87, %p88
    %p91 = scmp.ne.s32.totalorder %s74, %s90
    %p92 = scmp.eq.s32.totalorder %s14, 0
    %p93 = por %p91, %p92
    %p94 = scmp.le.s32.totalorder 1, %s8
    %p95 = scmp.lt.s32.totalorder %s8, 3
    %p96 = pnand %p94, %p95
    %p97 = pneg %p96
    // Predicated region
    $region9: #{s2cnn_equators_forward.14} parent=5 // pred_check
      _
    $region10: #{s2cnn_equators_forward.14} parent=5 // pred_check_branch
      %99 = sbr.rel (%p96) target = $region12
    $region11: #{s2cnn_equators_forward.14} parent=5 // pred_region
      %s100 = ssub.s32 %s8, 1
    $region12: #{s2cnn_equators_forward.14} parent=5 // pred_fallthru
      _
    %p101 = scmp.lt.s32.totalorder %s8, 2
    // Predicated region
    $region13: #{s2cnn_equators_forward.14} parent=5 // pred_check
      %p102 = pneg %p101
    $region14: #{s2cnn_equators_forward.14} parent=5 // pred_check_branch
      %104 = sbr.rel (%p102) target = $region16
    $region15: #{s2cnn_equators_forward.14} parent=5 // pred_region
      // Predicated region
      $region17: #{s2cnn_equators_forward.14} parent=15 // pred_check
        %p105 = pneg %p28
      $region18: #{s2cnn_equators_forward.14} parent=15 // pred_check_branch
        %107 = sbr.rel (%p105) target = $region20
      $region19: #{s2cnn_equators_forward.14} parent=15 // pred_region
        %p108 = scmp.lt.s32.totalorder %s8, 1
        %s109 = scalar_select %p108, %s8, 1
        %s110 = smul.addr %s109, 8
        %s111 = scalar_lea.vmem %s0, %s110
      $region20: #{s2cnn_equators_forward.14} parent=15 // pred_fallthru
        _
      // Predicated region
      $region21: #{s2cnn_equators_forward.14} parent=15 // pred_check
        %p112 = pneg %p54
      $region22: #{s2cnn_equators_forward.14} parent=15 // pred_check_branch
        %114 = sbr.rel (%p112) target = $region24
      $region23: #{s2cnn_equators_forward.14} parent=15 // pred_region
        %p115 = scmp.lt.s32.totalorder %s8, 1
        %s116 = scalar_select %p115, %s8, 1
        %s117 = smul.addr %s116, 3
        %s118 = smul.addr %s117, 8
        %s119 = scalar_lea.vmem %s1, %s118
      $region24: #{s2cnn_equators_forward.14} parent=15 // pred_fallthru
        _
    $region16: #{s2cnn_equators_forward.14} parent=5 // pred_fallthru
      _
    %p120 = scmp.le.s32.totalorder 1, %s8
    %p121 = scmp.lt.s32.totalorder %s8, 3
    %p122 = pnand %p120, %p121
    %p123 = pneg %p122
    // Predicated region
    $region25: #{s2cnn_equators_forward.14} parent=5 // pred_check
      _
    $region26: #{s2cnn_equators_forward.14} parent=5 // pred_check_branch
      %125 = sbr.rel (%p122) target = $region28
    $region27: #{s2cnn_equators_forward.14} parent=5 // pred_region
      %s126 = ssub.s32 %s8, 1
      %p127 = scmp.lt.s32.totalorder %s13, 1
      %s128 = scalar_select %p127, %s13, 1
      %s129 = smul.addr %s128, 8
      %s130 = scalar_lea.vmem %s0, %s129
      %p131 = pneg %p34
      %p132 = pneg %p31
      %p133 = scmp.lt.s32.totalorder %s13, 1
      %s134 = scalar_select %p133, %s13, 1
      %s135 = smul.addr %s134, 3
      %s136 = smul.addr %s135, 8
      %s137 = scalar_lea.vmem %s1, %s136
      %p138 = pneg %p60
      %p139 = pneg %p57
      %p140 = pneg %p86
      %p141 = pneg %p83
      %p142 = scmp.lt.s32.totalorder %s13, 1
      %s143 = scalar_select %p142, %s13, 1
      %s144 = smul.addr %s143, 8
      %s145 = scalar_lea.vmem %s2, %s144
      %p146 = scmp.lt.s32.totalorder %s13, 1
      %s147 = scalar_select %p146, %s13, 1
      %s148 = smul.addr %s147, 8
      %s149 = scalar_lea.vmem %s0, %s148
      %p150 = scmp.lt.s32.totalorder %s13, 1
      %s151 = scalar_select %p150, %s13, 1
      %s152 = smul.addr %s151, 3
      %s153 = smul.addr %s152, 8
      %s154 = scalar_lea.vmem %s1, %s153
      %p155 = scmp.lt.s32.totalorder %s13, 1
      %s156 = scalar_select %p155, %s13, 1
      %s157 = smul.addr %s156, 8
      %s158 = scalar_lea.vmem %s2, %s157
      %v159 = vld [vmem:[%s149] sm:$0x3f]
      %v160 = vld [vmem:[%s154] sm:$0xff]
      %v161 = vld [vmem:[%s154 + $0x8] sm:$0xff]
      %v162 = vld [vmem:[%s154 + $0x10] sm:$0xff]
      %vm163 = vcmask 195584
      %v165 = vsel %vm163, %v159, 0
      %167 = vmatprep.subr.mxu0 0.0
      %168 = vmatpush1.msra.mxu0 0.0
      %169 = vmatprep.subr.mxu0 0.0
      %170 = vmatpush1.msra.mxu0 0.0
      %171 = vmatprep.subr.mxu0 0.0
      %172 = vmatpush1.msra.mxu0 0.0
      %173 = vmatprep.subr.mxu0 0.0
      %174 = vmatpush1.msra.mxu0 0.0
      %175 = vmatprep.subr.mxu0 0.0
      %176 = vmatpush1.msra.mxu0 0.0
      %177 = vmatprep.subr.mxu0 0.0
      %178 = vmatpush1.msra.mxu0 0.0
      %179 = vmatprep.subr.mxu0 0.0
      %180 = vmatpush1.msra.mxu0 0.0
      %181 = vmatprep.subr.mxu0 0.0
      %182 = vmatpush1.msra.mxu0 0.0
      %183 = vmatprep.subr.mxu0 0.0
      %184 = vmatpush1.msra.mxu0 0.0
      %185 = vmatprep.subr.mxu0 0.0
      %186 = vmatpush1.msra.mxu0 0.0
      %187 = vmatprep.subr.mxu0 0.0
      %188 = vmatpush1.msra.mxu0 0.0
      %189 = vmatprep.subr.mxu0 0.0
      %190 = vmatpush1.msra.mxu0 0.0
      %191 = vmatprep.subr.mxu0 0.0
      %192 = vmatpush1.msra.mxu0 0.0
      %193 = vmatprep.subr.mxu0 0.0
      %194 = vmatpush1.msra.mxu0 %v162
      %195 = vmatprep.subr.mxu0 0.0
      %196 = vmatpush1.msra.mxu0 %v161
      %197 = vmatprep.subr.mxu0 0.0
      %198 = vmatpush1.msra.mxu0 %v160
      %199 = vmatprep.subr.mxu0 0.0
      %200 = vmatpush2.msra.mxu0 0.0
      %201 = vmatprep.subr.mxu0 0.0
      %202 = vmatpush2.msra.mxu0 0.0
      %203 = vmatprep.subr.mxu0 0.0
      %204 = vmatpush2.msra.mxu0 0.0
      %205 = vmatprep.subr.mxu0 0.0
      %206 = vmatpush2.msra.mxu0 0.0
      %207 = vmatprep.subr.mxu0 0.0
      %208 = vmatpush2.msra.mxu0 0.0
      %209 = vmatprep.subr.mxu0 0.0
      %210 = vmatpush2.msra.mxu0 0.0
      %211 = vmatprep.subr.mxu0 0.0
      %212 = vmatpush2.msra.mxu0 0.0
      %213 = vmatprep.subr.mxu0 0.0
      %214 = vmatpush2.msra.mxu0 0.0
      %215 = vmatprep.subr.mxu0 0.0
      %216 = vmatpush2.msra.mxu0 0.0
      %217 = vmatprep.subr.mxu0 0.0
      %218 = vmatpush2.msra.mxu0 0.0
      %219 = vmatprep.subr.mxu0 0.0
      %220 = vmatpush2.msra.mxu0 0.0
      %221 = vmatprep.subr.mxu0 0.0
      %222 = vmatpush2.msra.mxu0 0.0
      %223 = vmatprep.subr.mxu0 0.0
      %224 = vmatpush2.msra.mxu0 0.0
      %225 = vmatprep.subr.mxu0 0.0
      %226 = vmatpush2.msra.mxu0 0.0
      %227 = vmatprep.subr.mxu0 0.0
      %228 = vmatpush2.msra.mxu0 0.0
      %229 = vmatprep.subr.mxu0 0.0
      %230 = vmatpush2.msra.mxu0 0.0
      %231 = vmatprep.mubr.f32.mxu0 0.0
      %232 = vmatmul.mubr.f32.gmra.mxu0 %v165
      %v233 = vpop.f32.mrf.mxu0
      %v234 = vadd.f32 0.0, %v233
      %v235 = vpop.f32.mrf.mxu0
      %236 = vdwg.mxu0
      %vm237 = vcmask 242688
      %238 = vst.msk [vmem:[%s158] sm:$0x3f] %vm237, %v234
      %p239 = scmp.lt.s32.totalorder %s13, 1
      %s240 = scalar_select %p239, %s13, 1
      %s241 = smul.addr %s240, 8
      %s242 = scalar_lea.vmem %s2, %s241
      // Predicated region
      $region29: #{s2cnn_equators_forward.14} parent=27 // pred_check
        %p243 = pneg %p83
      $region30: #{s2cnn_equators_forward.14} parent=27 // pred_check_branch
        %245 = sbr.rel (%p243) target = $region32
      $region31: #{s2cnn_equators_forward.14} parent=27 // pred_region
        _
      $region32: #{s2cnn_equators_forward.14} parent=27 // pred_fallthru
        _
    $region28: #{s2cnn_equators_forward.14} parent=5 // pred_fallthru
      _
    %p246 = scmp.le.s32.totalorder 2, %s8
    // Predicated region
    $region33: #{s2cnn_equators_forward.14} parent=5 // pred_check
      %p247 = pneg %p246
    $region34: #{s2cnn_equators_forward.14} parent=5 // pred_check_branch
      %249 = sbr.rel (%p247) target = $region36
    $region35: #{s2cnn_equators_forward.14} parent=5 // pred_region
      %s250 = ssub.s32 %s8, 2
      // Predicated region
      $region37: #{s2cnn_equators_forward.14} parent=35 // pred_check
        %p251 = pneg %p89
      $region38: #{s2cnn_equators_forward.14} parent=35 // pred_check_branch
        %253 = sbr.rel (%p251) target = $region40
      $region39: #{s2cnn_equators_forward.14} parent=35 // pred_region
        %p254 = scmp.lt.s32.totalorder %s14, 1
        %s255 = scalar_select %p254, %s14, 1
        %s256 = smul.addr %s255, 8
        %s257 = scalar_lea.vmem %s2, %s256
      $region40: #{s2cnn_equators_forward.14} parent=35 // pred_fallthru
        _
    $region36: #{s2cnn_equators_forward.14} parent=5 // pred_fallthru
      _
  $region6: #{s2cnn_equators_forward.14} parent=0 // loop_footer
    %s12 = sadd.s32 1, %s8
  $region7: #{s2cnn_equators_forward.14} parent=0 // loop_footer_branch
    %7 = sbr.rel target = $region3
  $region8: #{s2cnn_equators_forward.14} parent=0 // loop_exit
    _

// kernel: s2cnn_equators_forward.15
$region0: #{s2cnn_equators_forward.15}
  #allocation0 [shape = 'u32[]', space=smem, size = 0x4, offset = 0x4, fixed_abs, tag = 'smem constant byte address 0x4 - core index']
  #allocation1 [shape = 'u32[144,128]{1,0:T(1,128)}', space=vmem, size = 0x12000, scoped, tag = 'internal scratch']
  #allocation2 [shape = 'f32[10,64]{1,0:T(8,128)}', space=vmem, size = 0x2000, scoped, tag = 'scratch operand']
  %s0 = inlined_call_operand.vmem [shape: f32[10,20], index: 0, kind: input, shape index: {}]
  %s1 = inlined_call_operand.vmem [shape: f32[20,64], index: 1, kind: input, shape index: {}]
  %s2 = inlined_call_operand.vmem [shape: f32[10,1], index: 2, kind: input, shape index: {}]
  %s3 = inlined_call_operand.vmem [shape: f32[10,64], index: 3, kind: output, shape index: {}]
  %s4 = sld [smem:[#allocation0]]
  $region30: #{s2cnn_equators_forward.15} parent=0
    _
  %s6 = ssub.s32 1, %s4
  %s7 = scalar_select 0, %s6, %s4
  // Predicated region
  $region2: #{s2cnn_equators_forward.15} parent=0 // pred_check
    _
  $region3: #{s2cnn_equators_forward.15} parent=0 // pred_check_branch
    %9 = sbr.rel (0) target = $region5
  $region4: #{s2cnn_equators_forward.15} parent=0 // pred_region
    _
  $region5: #{s2cnn_equators_forward.15} parent=0 // pred_fallthru
    _
  // Predicated region
  $region6: #{s2cnn_equators_forward.15} parent=0 // pred_check
    _
  $region7: #{s2cnn_equators_forward.15} parent=0 // pred_check_branch
    %11 = sbr.rel (0) target = $region9
  $region8: #{s2cnn_equators_forward.15} parent=0 // pred_region
    _
  $region9: #{s2cnn_equators_forward.15} parent=0 // pred_fallthru
    _
  // Predicated region
  $region10: #{s2cnn_equators_forward.15} parent=0 // pred_check
    _
  $region11: #{s2cnn_equators_forward.15} parent=0 // pred_check_branch
    %13 = sbr.rel (0) target = $region13
  $region12: #{s2cnn_equators_forward.15} parent=0 // pred_region
    _
  $region13: #{s2cnn_equators_forward.15} parent=0 // pred_fallthru
    _
  %p14 = scmp.eq.s32.totalorder 0, 0
  // Predicated region
  $region14: #{s2cnn_equators_forward.15} parent=0 // pred_check
    %p15 = pneg %p14
  $region15: #{s2cnn_equators_forward.15} parent=0 // pred_check_branch
    %17 = sbr.rel (%p15) target = $region17
  $region16: #{s2cnn_equators_forward.15} parent=0 // pred_region
    %vm18 = vcmask 523264
    %19 = vst.msk [vmem:[#allocation2] sm:$0xff] %vm18, 0.0
    %vm20 = vcmask 517120
    %21 = vst.msk [vmem:[#allocation2 + $0x8] sm:$0x3] %vm20, 0.0
  $region17: #{s2cnn_equators_forward.15} parent=0 // pred_fallthru
    _
  %v22 = vld [vmem:[%s0] sm:$0xff]
  %v23 = vld [vmem:[%s0 + $0x8] sm:$0x3]
  %v24 = vld [vmem:[#allocation2] sm:$0xff]
  %v25 = vld [vmem:[#allocation2 + $0x8] sm:$0x3]
  %v26 = vld [vmem:[%s1] sm:$0xff]
  %v27 = vld [vmem:[%s1 + $0x8] sm:$0xff]
  %v28 = vld [vmem:[%s1 + $0x10] sm:$0xf]
  %vm29 = vcmask 162816
  %v31 = vsel %vm29, %v22, 0
  %v34 = vsel %vm29, %v23, 0
  %vm36 = vcmask 1043456
  %v38 = vsel %vm36, %v28, 0
  %40 = vmatprep.subr.mxu0 0.0
  %41 = vmatpush1.msra.mxu0 0.0
  %42 = vmatprep.subr.mxu0 0.0
  %43 = vmatpush1.msra.mxu0 0.0
  %44 = vmatprep.subr.mxu0 0.0
  %45 = vmatpush1.msra.mxu0 0.0
  %46 = vmatprep.subr.mxu0 0.0
  %47 = vmatpush1.msra.mxu0 0.0
  %48 = vmatprep.subr.mxu0 0.0
  %49 = vmatpush1.msra.mxu0 0.0
  %50 = vmatprep.subr.mxu0 0.0
  %51 = vmatpush1.msra.mxu0 0.0
  %52 = vmatprep.subr.mxu0 0.0
  %53 = vmatpush1.msra.mxu0 0.0
  %54 = vmatprep.subr.mxu0 0.0
  %55 = vmatpush1.msra.mxu0 0.0
  %56 = vmatprep.subr.mxu0 0.0
  %57 = vmatpush1.msra.mxu0 0.0
  %58 = vmatprep.subr.mxu0 0.0
  %59 = vmatpush1.msra.mxu0 0.0
  %60 = vmatprep.subr.mxu0 0.0
  %61 = vmatpush1.msra.mxu0 0.0
  %62 = vmatprep.subr.mxu0 0.0
  %63 = vmatpush1.msra.mxu0 0.0
  %64 = vmatprep.subr.mxu0 0.0
  %65 = vmatpush1.msra.mxu0 0.0
  %66 = vmatprep.subr.mxu0 0.0
  %67 = vmatpush1.msra.mxu0 %v38
  %68 = vmatprep.subr.mxu0 0.0
  %69 = vmatpush1.msra.mxu0 %v27
  %70 = vmatprep.subr.mxu0 0.0
  %71 = vmatpush1.msra.mxu0 %v26
  %72 = vmatprep.subr.mxu0 0.0
  %73 = vmatpush2.msra.mxu0 0.0
  %74 = vmatprep.subr.mxu0 0.0
  %75 = vmatpush2.msra.mxu0 0.0
  %76 = vmatprep.subr.mxu0 0.0
  %77 = vmatpush2.msra.mxu0 0.0
  %78 = vmatprep.subr.mxu0 0.0
  %79 = vmatpush2.msra.mxu0 0.0
  %80 = vmatprep.subr.mxu0 0.0
  %81 = vmatpush2.msra.mxu0 0.0
  %82 = vmatprep.subr.mxu0 0.0
  %83 = vmatpush2.msra.mxu0 0.0
  %84 = vmatprep.subr.mxu0 0.0
  %85 = vmatpush2.msra.mxu0 0.0
  %86 = vmatprep.subr.mxu0 0.0
  %87 = vmatpush2.msra.mxu0 0.0
  %88 = vmatprep.subr.mxu0 0.0
  %89 = vmatpush2.msra.mxu0 0.0
  %90 = vmatprep.subr.mxu0 0.0
  %91 = vmatpush2.msra.mxu0 0.0
  %92 = vmatprep.subr.mxu0 0.0
  %93 = vmatpush2.msra.mxu0 0.0
  %94 = vmatprep.subr.mxu0 0.0
  %95 = vmatpush2.msra.mxu0 0.0
  %96 = vmatprep.subr.mxu0 0.0
  %97 = vmatpush2.msra.mxu0 0.0
  %98 = vmatprep.subr.mxu0 0.0
  %99 = vmatpush2.msra.mxu0 0.0
  %100 = vmatprep.subr.mxu0 0.0
  %101 = vmatpush2.msra.mxu0 0.0
  %102 = vmatprep.subr.mxu0 0.0
  %103 = vmatpush2.msra.mxu0 0.0
  %104 = vmatprep.mubr.f32.mxu0 0.0
  %105 = vmatmul.mubr.f32.gmra.mxu0 %v31
  %v106 = vpop.f32.mrf.mxu0
  %v107 = vadd.f32 0.0, %v106
  %v108 = vpop.f32.mrf.mxu0
  %109 = vmatprep.mubr.f32.mxu0 0.0
  %110 = vmatmul.mubr.f32.gmra.mxu0 %v34
  %v111 = vpop.f32.mrf.mxu0
  %v112 = vadd.f32 0.0, %v111
  %v113 = vpop.f32.mrf.mxu0
  %114 = vdwg.mxu0
  %v115 = vadd.f32 %v24, %v107
  %v116 = vadd.f32 %v25, %v112
  %vm117 = vcmask 523264
  %118 = vst.msk [vmem:[#allocation2] sm:$0xff] %vm117, %v115
  %vm119 = vcmask 517120
  %120 = vst.msk [vmem:[#allocation2 + $0x8] sm:$0x3] %vm119, %v116
  // Predicated region
  $region18: #{s2cnn_equators_forward.15} parent=0 // pred_check
    %p121 = pneg %p14
  $region19: #{s2cnn_equators_forward.15} parent=0 // pred_check_branch
    %123 = sbr.rel (%p121) target = $region21
  $region20: #{s2cnn_equators_forward.15} parent=0 // pred_region
    %v124 = vld [vmem:[#allocation2] sm:$0xff]
    %v125 = vld [vmem:[#allocation2 + $0x8] sm:$0x3]
    %v126 = vld [vmem:[%s2] sm:$0xff]
    %v127 = vld [vmem:[%s2 + $0x8] sm:$0x3]
    %129 = vset.pattern.permute.xlu0 0
    %130 = vperm.xlu0 %129, %v126
    %v131 = vpop.permute.xlu0 %130
    %134 = vset.pattern.permute.xlu0 0
    %135 = vperm.xlu0 %134, %v127
    %v136 = vpop.permute.xlu0 %135
    %v138 = vadd.f32 %v124, %v131
    %v139 = vadd.f32 %v125, %v136
    %140 = vst.msk [vmem:[%s3] sm:$0xff] %vm117, %v138
    %141 = vst.msk [vmem:[%s3 + $0x8] sm:$0x3] %vm119, %v139
  $region21: #{s2cnn_equators_forward.15} parent=0 // pred_fallthru
    _
  // Predicated region
  $region22: #{s2cnn_equators_forward.15} parent=0 // pred_check
    _
  $region23: #{s2cnn_equators_forward.15} parent=0 // pred_check_branch
    %143 = sbr.rel (0) target = $region25
  $region24: #{s2cnn_equators_forward.15} parent=0 // pred_region
    _
  $region25: #{s2cnn_equators_forward.15} parent=0 // pred_fallthru
    _
  // Predicated region
  $region26: #{s2cnn_equators_forward.15} parent=0 // pred_check
    _
  $region27: #{s2cnn_equators_forward.15} parent=0 // pred_check_branch
    %145 = sbr.rel (0) target = $region29
  $region28: #{s2cnn_equators_forward.15} parent=0 // pred_region
    _
  $region29: #{s2cnn_equators_forward.15} parent=0 // pred_fallthru
    _

</llo_original>
